<compile_context>
chip_gen: v7x
topology: tpu7x:2x2x1
jax: 0.10.0
libtpu: 0.0.40
codegen_flags: <defaults>
</compile_context>

<pallas_src>
import functools

import jax
import jax.numpy as jnp
from jax.experimental import pallas as pl
from jax.experimental.pallas import tpu as pltpu

DATASET_CONFIG = {
    "svhn": ([0.4376821, 0.4437697, 0.47280442],
             [0.19803012, 0.20101562, 0.19703614], 32, 10),
    "cifar10": ([0.49139968, 0.48215841, 0.44653091],
                [0.24703223, 0.24348513, 0.26158784], 32, 10),
    "imagenet100": ([0.485, 0.456, 0.406],
                    [0.229, 0.224, 0.225], 224, 100),
}

_RESIDENT_MAX_WEIGHT_BYTES = 6 * 1024 * 1024   # 2x buffering still fits v5e's 16 MiB default scoped VMEM
_TILED_WEIGHT_TILE_BYTES = 2 * 1024 * 1024     # per-buffer weight tile target for the K-tiled path
_X_TILE_TARGET_BYTES = 4 * 1024 * 1024         # per-buffer activation tile target


def get_dataset_params(dataset):
    """JAX port of get_dataset_params: (1, 3, resol, resol) mean / std tensors."""
    mean, std, resol, _ = DATASET_CONFIG[dataset]
    mean_t = jnp.stack([jnp.full((resol, resol), m, dtype=jnp.float32) for m in mean])
    std_t = jnp.stack([jnp.full((resol, resol), s, dtype=jnp.float32) for s in std])
    return mean_t[None], std_t[None]  # (1, 3, resol, resol) each


def _round_up(x, m):
    return ((x + m - 1) // m) * m


# ----------------------------- kernels ------------------------------------- #

def _resident_kernel(x_ref, w_ref, b_ref, o_ref):
    """Whole folded weight resident in VMEM; one matmul + bias per batch tile."""
    o_ref[...] = (jnp.dot(x_ref[...], w_ref[...].astype(jnp.float32),
                          preferred_element_type=jnp.float32)
                  + b_ref[...]).astype(o_ref.dtype)


def _tiled_kernel(x_ref, w_ref, b_ref, o_ref, acc_ref):
    """Grid = (batch tiles, K tiles). K is the reduction axis (last, 'arbitrary')."""
    k = pl.program_id(1)

    @pl.when(k == 0)
    def _init():
        acc_ref[...] = jnp.zeros_like(acc_ref)

    acc_ref[...] += jnp.dot(x_ref[...], w_ref[...].astype(jnp.float32),
                            preferred_element_type=jnp.float32)

    @pl.when(k == pl.num_programs(1) - 1)
    def _finalize():
        o_ref[...] = (acc_ref[...] + b_ref[...]).astype(o_ref.dtype)


# ------------------------- one-time parameter fold ------------------------- #

def fold_pixel_head(mean_nchw, std_nchw, w, b, *, weight_dtype=jnp.bfloat16):
    """Fold the DatasetTransform into the linear head (exact algebra, f32):

        ((x/255 - mean)/std) @ W + b  ==  x @ W_eff + b_eff

    Returns (W_eff padded+cast, b_eff padded) ready for the kernel. Call ONCE
    at model-init time -- this is hoisted out of the per-forward path.
    """
    D, num_classes = w.shape
    mean_flat = mean_nchw.reshape(D).astype(jnp.float32)
    std_flat = std_nchw.reshape(D).astype(jnp.float32)
    w32 = w.astype(jnp.float32)
    w_eff = w32 * (1.0 / (255.0 * std_flat))[:, None]              # (D, num_classes)
    b_eff = b.astype(jnp.float32) - (mean_flat / std_flat) @ w32    # (num_classes,)

    NCp = _round_up(num_classes, 128)   # lane-dense output / unmasked stores
    Dp = _round_up(D, 128)              # all supported datasets already satisfy D % 128 == 0
    wp = jnp.zeros((Dp, NCp), weight_dtype).at[:D, :num_classes].set(
        w_eff.astype(weight_dtype))
    bp = jnp.zeros((1, NCp), jnp.float32).at[0, :num_classes].set(b_eff)
    return wp, bp


# ------------------------------ tiling picks -------------------------------- #

def _pick_tk(Dp, NCp, w_itemsize, target_bytes):
    """Largest tk that divides Dp, is a multiple of 128 and keeps the weight tile <= target."""
    best = 128
    tk = 128
    while tk <= Dp:
        if Dp % tk == 0 and tk * NCp * w_itemsize <= target_bytes:
            best = tk
        tk += 128
    return best


def _pick_tm(N, x_cols):
    """Batch tile: multiple of 8, <= 256, activation tile (f32) capped ~4 MiB."""
    Np16 = _round_up(max(N, 1), 16)
    cap = max(8, (_X_TILE_TARGET_BYTES // (x_cols * 4)) // 8 * 8)
    tm = max(8, min(Np16, 256, cap))
    Np = _round_up(Np16, tm)
    return tm, Np


# ------------------------------ forward pass -------------------------------- #

@functools.partial(jax.jit, static_argnames=("num_classes",))
def pixel_model_forward(x_nchw, w_eff, b_eff, *, num_classes):
    """PixelModel forward: normalization pre-folded into a Linear head, run on MXU."""
    N, C, H, W = x_nchw.shape
    D = C * H * W
    Dp, NCp = w_eff.shape
    w_itemsize = jnp.dtype(w_eff.dtype).itemsize

    xf = x_nchw.reshape(N, D).astype(jnp.float32)
    if Dp != D:  # never hit for the supported datasets (D % 128 == 0)
        xf = jnp.pad(xf, ((0, 0), (0, Dp - D)))

    w_bytes = Dp * NCp * w_itemsize

    if w_bytes <= _RESIDENT_MAX_WEIGHT_BYTES:
        # ---- Path A: whole folded weight resident in VMEM, grid over batch only ----
        tm, Np = _pick_tm(N, Dp)
        if Np != N:
            xf = jnp.pad(xf, ((0, Np - N), (0, 0)))

        cost = pl.CostEstimate(
            flops=2 * Np * Dp * NCp,
            transcendentals=0,
            bytes_accessed=Np * Dp * 4 + w_bytes + NCp * 4 + Np * NCp * 4)

        out_padded = pl.pallas_call(
            _resident_kernel,
            out_shape=jax.ShapeDtypeStruct((Np, NCp), jnp.float32),
            grid_spec=pltpu.PrefetchScalarGridSpec(
                num_scalar_prefetch=0,
                grid=(Np // tm,),
                in_specs=[
                    pl.BlockSpec((tm, Dp), lambda i: (i, 0)),    # x batch tile
                    pl.BlockSpec((Dp, NCp), lambda i: (0, 0)),   # resident folded weight
                    pl.BlockSpec((1, NCp), lambda i: (0, 0)),    # resident folded bias
                ],
                out_specs=pl.BlockSpec((tm, NCp), lambda i: (i, 0)),
            ),
            compiler_params=pltpu.CompilerParams(
                dimension_semantics=("parallel",)),
            cost_estimate=cost,
        )(xf, w_eff, b_eff)
    else:
        # ---- Path B: K-tiled reduction (large D, e.g. imagenet100) ----
        tk = _pick_tk(Dp, NCp, w_itemsize, _TILED_WEIGHT_TILE_BYTES)
        tm, Np = _pick_tm(N, tk)
        if Np != N:
            xf = jnp.pad(xf, ((0, Np - N), (0, 0)))

        cost = pl.CostEstimate(
            flops=2 * Np * Dp * NCp,
            transcendentals=0,
            bytes_accessed=Np * Dp * 4 + (Np // tm) * w_bytes + NCp * 4 + Np * NCp * 4)

        out_padded = pl.pallas_call(
            _tiled_kernel,
            out_shape=jax.ShapeDtypeStruct((Np, NCp), jnp.float32),
            grid_spec=pltpu.PrefetchScalarGridSpec(
                num_scalar_prefetch=0,
                grid=(Np // tm, Dp // tk),
                in_specs=[
                    pl.BlockSpec((tm, tk), lambda i, k: (i, k)),    # x tile
                    pl.BlockSpec((tk, NCp), lambda i, k: (k, 0)),   # weight K-tile
                    pl.BlockSpec((1, NCp), lambda i, k: (0, 0)),    # resident bias
                ],
                out_specs=pl.BlockSpec((tm, NCp), lambda i, k: (i, 0)),
                scratch_shapes=[pltpu.VMEM((tm, NCp), jnp.float32)],
            ),
            compiler_params=pltpu.CompilerParams(
                dimension_semantics=("parallel", "arbitrary"),
                vmem_limit_bytes=64 * 1024 * 1024),
            cost_estimate=cost,
        )(xf, w_eff, b_eff)

    return out_padded[:N, :num_classes]


if __name__ == "__main__":
    dataset = "cifar10"
    _, _, resol, num_classes = DATASET_CONFIG[dataset]
    N, C = 2, 3
    D = C * resol * resol

    key = jax.random.PRNGKey(0)
    kx, kw, kb = jax.random.split(key, 3)

    # Input image with pixels in [0, 255] (as PixelModel expects), NCHW.
    x = jax.random.uniform(kx, (N, C, resol, resol), dtype=jnp.float32) * 255.0

    # Deterministic synthetic "model" parameters: flatten + Linear(D, num_classes).
    # TODO(synk): the real `model` arg of PixelModel is an arbitrary nn.Module;
    # only a flatten+Linear head is implemented here.
    w = (jax.random.normal(kw, (D, num_classes), dtype=jnp.float32)
         * (1.0 / jnp.sqrt(jnp.float32(D))))
    b = jax.random.normal(kb, (num_classes,), dtype=jnp.float32) * 0.01

    mean, std = get_dataset_params(dataset)

    # One-time fold/cast/pad of the head parameters (hoisted out of the forward path).
    w_eff, b_eff = fold_pixel_head(mean, std, w, b)

    out = pixel_model_forward(x, w_eff, b_eff, num_classes=num_classes)
    out = jax.block_until_ready(out)

    # Pure-JAX f32 reference of the ORIGINAL (unfolded) forward pass.
    xn_ref = (x / 255.0 - mean) / std
    ref = xn_ref.reshape(N, D) @ w + b[None, :]
    assert out.shape == (N, num_classes)
    # Tolerance for bf16-quantized folded weights (f32 activations + f32 accumulation).
    assert jnp.allclose(out, ref, atol=5e-2, rtol=5e-2), "mismatch vs reference"

    print("KERNEL_OK")
</pallas_src>

<mosaic_0001>
module attributes {stable_mosaic.version = 11 : i64} {
  func.func @_resident_kernel(%arg0: i32, %arg1: memref<16x3072xf32, #tpu.memory_space<vmem>>, %arg2: memref<3072x128xbf16, #tpu.memory_space<vmem>>, %arg3: memref<1x128xf32, #tpu.memory_space<vmem>>, %arg4: memref<16x128xf32, #tpu.memory_space<vmem>>) attributes {dimension_semantics = [#tpu.dimension_semantics<parallel>], iteration_bounds = array<i64: 1>, scalar_prefetch = 0 : i64, scratch_operands = 0 : i64, tpu.core_type = #tpu.core_type<tc>, window_params = [{transform_indices = @transform_0, window_bounds = array<i64: 16, 3072>}, {pipeline_mode = #tpu.pipeline_mode<synchronous>, transform_indices = @transform_1, window_bounds = array<i64: 3072, 128>}, {pipeline_mode = #tpu.pipeline_mode<synchronous>, transform_indices = @transform_2, window_bounds = array<i64: 1, 128>}, {transform_indices = @transform_3, window_bounds = array<i64: 16, 128>}]} {
    %c0 = arith.constant 0 : index
    %c0_0 = arith.constant 0 : index
    %0 = vector.load %arg1[%c0, %c0_0] : memref<16x3072xf32, #tpu.memory_space<vmem>>, vector<16x3072xf32>
    %c0_1 = arith.constant 0 : index
    %c0_2 = arith.constant 0 : index
    %1 = vector.load %arg2[%c0_1, %c0_2] : memref<3072x128xbf16, #tpu.memory_space<vmem>>, vector<3072x128xbf16>
    %2 = arith.extf %1 : vector<3072x128xbf16> to vector<3072x128xf32>
    %cst = arith.constant dense<0.000000e+00> : vector<16x128xf32>
    %3 = tpu.matmul %0, %2, %cst {dimension_numbers = #tpu.dot_dimension_numbers<[1], [0], [0], [1], [0, 0, 1, 1], [], []>} : vector<16x3072xf32>, vector<3072x128xf32>, vector<16x128xf32> -> vector<16x128xf32>
    %c0_3 = arith.constant 0 : index
    %c0_4 = arith.constant 0 : index
    %4 = vector.load %arg3[%c0_3, %c0_4] : memref<1x128xf32, #tpu.memory_space<vmem>>, vector<1x128xf32>
    %5 = vector.broadcast %4 : vector<1x128xf32> to vector<16x128xf32>
    %6 = arith.addf %3, %5 : vector<16x128xf32>
    %c0_5 = arith.constant 0 : index
    %c0_6 = arith.constant 0 : index
    %7 = vector.load %arg4[%c0_5, %c0_6] : memref<16x128xf32, #tpu.memory_space<vmem>>, vector<16x128xf32>
    tpu.vector_store %arg4[%c0_5, %c0_6], %6 {strides = array<i32>} : memref<16x128xf32, #tpu.memory_space<vmem>>, vector<16x128xf32>,
    return
  }
  func.func @transform_0(%arg0: i32) -> (i32, i32) {
    %c0_i32 = arith.constant 0 : i32
    %c0_i32_0 = arith.constant 0 : i32
    return %arg0, %c0_i32 : i32, i32
  }
  func.func @transform_1(%arg0: i32) -> (i32, i32) {
    %c0_i32 = arith.constant 0 : i32
    %c0_i32_0 = arith.constant 0 : i32
    %c0_i32_1 = arith.constant 0 : i32
    return %c0_i32, %c0_i32_0 : i32, i32
  }
  func.func @transform_2(%arg0: i32) -> (i32, i32) {
    %c0_i32 = arith.constant 0 : i32
    %c0_i32_0 = arith.constant 0 : i32
    %c0_i32_1 = arith.constant 0 : i32
    return %c0_i32, %c0_i32_0 : i32, i32
  }
  func.func @transform_3(%arg0: i32) -> (i32, i32) {
    %c0_i32 = arith.constant 0 : i32
    %c0_i32_0 = arith.constant 0 : i32
    return %arg0, %c0_i32 : i32, i32
  }
}

</mosaic_0001>

<llo_original>
// kernel: pixel_model_forward.1
$region0: #{pixel_model_forward.1}
  #allocation0 [shape = 'u32[]', space=smem, size = 0x4, offset = 0x4, fixed_abs, tag = 'smem constant byte address 0x4 - core index']
  #allocation1 [shape = 'u32[144,128]{1,0:T(1,128)}', space=vmem, size = 0x12000, scoped, tag = 'internal scratch']
  %s0 = inlined_call_operand.vmem [shape: f32[16,3072], index: 0, kind: input, shape index: {}]
  %s1 = inlined_call_operand.hbm [shape: bf16[3072,128], index: 1, kind: input, shape index: {}]
  %s2 = inlined_call_operand.vmem [shape: f32[1,128], index: 2, kind: input, shape index: {}]
  %s3 = inlined_call_operand.vmem [shape: f32[16,128], index: 3, kind: output, shape index: {}]
  %s4 = sld [smem:[#allocation0]]
  $region26: #{pixel_model_forward.1} parent=0
    _
  %s6 = ssub.s32 1, %s4
  %s7 = scalar_select 0, %s6, %s4
  $region1: #{pixel_model_forward.1} parent=0
    #allocation2 [shape = 'u8[786432]{0}', space=vmem, size = 0xc0000, scoped, tag = 'input window, operand 1, single buffered']
    #allocation3 [shape = 's32[1]{0}', space=sflag, size = 0x4, scoped, tag = 'scoped memory for pixel_model_forward.1']
    %8 = vsyncpa [#allocation3], 0
    // Predicated region
    $region2: #{pixel_model_forward.1} parent=1 // pred_check
      _
    $region3: #{pixel_model_forward.1} parent=1 // pred_check_branch
      %10 = sbr.rel (0) target = $region5
    $region4: #{pixel_model_forward.1} parent=1 // pred_region
      _
    $region5: #{pixel_model_forward.1} parent=1 // pred_fallthru
      _
    // Predicated region
    $region6: #{pixel_model_forward.1} parent=1 // pred_check
      _
    $region7: #{pixel_model_forward.1} parent=1 // pred_check_branch
      %12 = sbr.rel (0) target = $region9
    $region8: #{pixel_model_forward.1} parent=1 // pred_region
      %s14 = ssub.s32 24576, 24576
      %15 = vsyncadd [#allocation3], %s14
      %s16 = sshll.u32 [#allocation2], 4
      %s17 = int_to_ptr.vmem [resolvable:$true] %s16
      %22 = dma.hbm_to_vmem [thread:$0]  %s1, 24576, %s17, [#allocation3], 64, 64, 4
    $region9: #{pixel_model_forward.1} parent=1 // pred_fallthru
      _
    // Predicated region
    $region10: #{pixel_model_forward.1} parent=1 // pred_check
      _
    $region11: #{pixel_model_forward.1} parent=1 // pred_check_branch
      %24 = sbr.rel (0) target = $region13
    $region12: #{pixel_model_forward.1} parent=1 // pred_region
      _
    $region13: #{pixel_model_forward.1} parent=1 // pred_fallthru
      _
    // Predicated region
    $region14: #{pixel_model_forward.1} parent=1 // pred_check
      _
    $region15: #{pixel_model_forward.1} parent=1 // pred_check_branch
      %26 = sbr.rel (0) target = $region17
    $region16: #{pixel_model_forward.1} parent=1 // pred_region
      %27 = dma.done [#allocation3], 24576
    $region17: #{pixel_model_forward.1} parent=1 // pred_fallthru
      _
    %v28 = vld [vmem:[%s0] sm:$0xff]
    %v29 = vld [vmem:[%s0 + $0x8] sm:$0xff]
    %v30 = vld [vmem:[%s0 + $0x10] sm:$0xff]
    %v31 = vld [vmem:[%s0 + $0x18] sm:$0xff]
    %v32 = vld [vmem:[%s0 + $0x20] sm:$0xff]
    %v33 = vld [vmem:[%s0 + $0x28] sm:$0xff]
    %v34 = vld [vmem:[%s0 + $0x30] sm:$0xff]
    %v35 = vld [vmem:[%s0 + $0x38] sm:$0xff]
    %v36 = vld [vmem:[%s0 + $0x40] sm:$0xff]
    %v37 = vld [vmem:[%s0 + $0x48] sm:$0xff]
    %v38 = vld [vmem:[%s0 + $0x50] sm:$0xff]
    %v39 = vld [vmem:[%s0 + $0x58] sm:$0xff]
    %v40 = vld [vmem:[%s0 + $0x60] sm:$0xff]
    %v41 = vld [vmem:[%s0 + $0x68] sm:$0xff]
    %v42 = vld [vmem:[%s0 + $0x70] sm:$0xff]
    %v43 = vld [vmem:[%s0 + $0x78] sm:$0xff]
    %v44 = vld [vmem:[%s0 + $0x80] sm:$0xff]
    %v45 = vld [vmem:[%s0 + $0x88] sm:$0xff]
    %v46 = vld [vmem:[%s0 + $0x90] sm:$0xff]
    %v47 = vld [vmem:[%s0 + $0x98] sm:$0xff]
    %v48 = vld [vmem:[%s0 + $0xa0] sm:$0xff]
    %v49 = vld [vmem:[%s0 + $0xa8] sm:$0xff]
    %v50 = vld [vmem:[%s0 + $0xb0] sm:$0xff]
    %v51 = vld [vmem:[%s0 + $0xb8] sm:$0xff]
    %v52 = vld [vmem:[%s0 + $0xc0] sm:$0xff]
    %v53 = vld [vmem:[%s0 + $0xc8] sm:$0xff]
    %v54 = vld [vmem:[%s0 + $0xd0] sm:$0xff]
    %v55 = vld [vmem:[%s0 + $0xd8] sm:$0xff]
    %v56 = vld [vmem:[%s0 + $0xe0] sm:$0xff]
    %v57 = vld [vmem:[%s0 + $0xe8] sm:$0xff]
    %v58 = vld [vmem:[%s0 + $0xf0] sm:$0xff]
    %v59 = vld [vmem:[%s0 + $0xf8] sm:$0xff]
    %v60 = vld [vmem:[%s0 + $0x100] sm:$0xff]
    %v61 = vld [vmem:[%s0 + $0x108] sm:$0xff]
    %v62 = vld [vmem:[%s0 + $0x110] sm:$0xff]
    %v63 = vld [vmem:[%s0 + $0x118] sm:$0xff]
    %v64 = vld [vmem:[%s0 + $0x120] sm:$0xff]
    %v65 = vld [vmem:[%s0 + $0x128] sm:$0xff]
    %v66 = vld [vmem:[%s0 + $0x130] sm:$0xff]
    %v67 = vld [vmem:[%s0 + $0x138] sm:$0xff]
    %v68 = vld [vmem:[%s0 + $0x140] sm:$0xff]
    %v69 = vld [vmem:[%s0 + $0x148] sm:$0xff]
    %v70 = vld [vmem:[%s0 + $0x150] sm:$0xff]
    %v71 = vld [vmem:[%s0 + $0x158] sm:$0xff]
    %v72 = vld [vmem:[%s0 + $0x160] sm:$0xff]
    %v73 = vld [vmem:[%s0 + $0x168] sm:$0xff]
    %v74 = vld [vmem:[%s0 + $0x170] sm:$0xff]
    %v75 = vld [vmem:[%s0 + $0x178] sm:$0xff]
    %v76 = vld [vmem:[#allocation2] sm:$0xf]
    %v77 = vld [vmem:[#allocation2 + $0x4] sm:$0xf]
    %v78 = vld [vmem:[#allocation2 + $0x8] sm:$0xf]
    %v79 = vld [vmem:[#allocation2 + $0xc] sm:$0xf]
    %v80 = vld [vmem:[#allocation2 + $0x10] sm:$0xf]
    %v81 = vld [vmem:[#allocation2 + $0x14] sm:$0xf]
    %v82 = vld [vmem:[#allocation2 + $0x18] sm:$0xf]
    %v83 = vld [vmem:[#allocation2 + $0x1c] sm:$0xf]
    %v84 = vld [vmem:[#allocation2 + $0x20] sm:$0xf]
    %v85 = vld [vmem:[#allocation2 + $0x24] sm:$0xf]
    %v86 = vld [vmem:[#allocation2 + $0x28] sm:$0xf]
    %v87 = vld [vmem:[#allocation2 + $0x2c] sm:$0xf]
    %v88 = vld [vmem:[#allocation2 + $0x30] sm:$0xf]
    %v89 = vld [vmem:[#allocation2 + $0x34] sm:$0xf]
    %v90 = vld [vmem:[#allocation2 + $0x38] sm:$0xf]
    %v91 = vld [vmem:[#allocation2 + $0x3c] sm:$0xf]
    %v92 = vld [vmem:[#allocation2 + $0x40] sm:$0xf]
    %v93 = vld [vmem:[#allocation2 + $0x44] sm:$0xf]
    %v94 = vld [vmem:[#allocation2 + $0x48] sm:$0xf]
    %v95 = vld [vmem:[#allocation2 + $0x4c] sm:$0xf]
    %v96 = vld [vmem:[#allocation2 + $0x50] sm:$0xf]
    %v97 = vld [vmem:[#allocation2 + $0x54] sm:$0xf]
    %v98 = vld [vmem:[#allocation2 + $0x58] sm:$0xf]
    %v99 = vld [vmem:[#allocation2 + $0x5c] sm:$0xf]
    %v100 = vld [vmem:[#allocation2 + $0x60] sm:$0xf]
    %v101 = vld [vmem:[#allocation2 + $0x64] sm:$0xf]
    %v102 = vld [vmem:[#allocation2 + $0x68] sm:$0xf]
    %v103 = vld [vmem:[#allocation2 + $0x6c] sm:$0xf]
    %v104 = vld [vmem:[#allocation2 + $0x70] sm:$0xf]
    %v105 = vld [vmem:[#allocation2 + $0x74] sm:$0xf]
    %v106 = vld [vmem:[#allocation2 + $0x78] sm:$0xf]
    %v107 = vld [vmem:[#allocation2 + $0x7c] sm:$0xf]
    %v108 = vld [vmem:[#allocation2 + $0x80] sm:$0xf]
    %v109 = vld [vmem:[#allocation2 + $0x84] sm:$0xf]
    %v110 = vld [vmem:[#allocation2 + $0x88] sm:$0xf]
    %v111 = vld [vmem:[#allocation2 + $0x8c] sm:$0xf]
    %v112 = vld [vmem:[#allocation2 + $0x90] sm:$0xf]
    %v113 = vld [vmem:[#allocation2 + $0x94] sm:$0xf]
    %v114 = vld [vmem:[#allocation2 + $0x98] sm:$0xf]
    %v115 = vld [vmem:[#allocation2 + $0x9c] sm:$0xf]
    %v116 = vld [vmem:[#allocation2 + $0xa0] sm:$0xf]
    %v117 = vld [vmem:[#allocation2 + $0xa4] sm:$0xf]
    %v118 = vld [vmem:[#allocation2 + $0xa8] sm:$0xf]
    %v119 = vld [vmem:[#allocation2 + $0xac] sm:$0xf]
    %v120 = vld [vmem:[#allocation2 + $0xb0] sm:$0xf]
    %v121 = vld [vmem:[#allocation2 + $0xb4] sm:$0xf]
    %v122 = vld [vmem:[#allocation2 + $0xb8] sm:$0xf]
    %v123 = vld [vmem:[#allocation2 + $0xbc] sm:$0xf]
    %v124 = vld [vmem:[#allocation2 + $0xc0] sm:$0xf]
    %v125 = vld [vmem:[#allocation2 + $0xc4] sm:$0xf]
    %v126 = vld [vmem:[#allocation2 + $0xc8] sm:$0xf]
    %v127 = vld [vmem:[#allocation2 + $0xcc] sm:$0xf]
    %v128 = vld [vmem:[#allocation2 + $0xd0] sm:$0xf]
    %v129 = vld [vmem:[#allocation2 + $0xd4] sm:$0xf]
    %v130 = vld [vmem:[#allocation2 + $0xd8] sm:$0xf]
    %v131 = vld [vmem:[#allocation2 + $0xdc] sm:$0xf]
    %v132 = vld [vmem:[#allocation2 + $0xe0] sm:$0xf]
    %v133 = vld [vmem:[#allocation2 + $0xe4] sm:$0xf]
    %v134 = vld [vmem:[#allocation2 + $0xe8] sm:$0xf]
    %v135 = vld [vmem:[#allocation2 + $0xec] sm:$0xf]
    %v136 = vld [vmem:[#allocation2 + $0xf0] sm:$0xf]
    %v137 = vld [vmem:[#allocation2 + $0xf4] sm:$0xf]
    %v138 = vld [vmem:[#allocation2 + $0xf8] sm:$0xf]
    %v139 = vld [vmem:[#allocation2 + $0xfc] sm:$0xf]
    %v140 = vld [vmem:[#allocation2 + $0x100] sm:$0xf]
    %v141 = vld [vmem:[#allocation2 + $0x104] sm:$0xf]
    %v142 = vld [vmem:[#allocation2 + $0x108] sm:$0xf]
    %v143 = vld [vmem:[#allocation2 + $0x10c] sm:$0xf]
    %v144 = vld [vmem:[#allocation2 + $0x110] sm:$0xf]
    %v145 = vld [vmem:[#allocation2 + $0x114] sm:$0xf]
    %v146 = vld [vmem:[#allocation2 + $0x118] sm:$0xf]
    %v147 = vld [vmem:[#allocation2 + $0x11c] sm:$0xf]
    %v148 = vld [vmem:[#allocation2 + $0x120] sm:$0xf]
    %v149 = vld [vmem:[#allocation2 + $0x124] sm:$0xf]
    %v150 = vld [vmem:[#allocation2 + $0x128] sm:$0xf]
    %v151 = vld [vmem:[#allocation2 + $0x12c] sm:$0xf]
    %v152 = vld [vmem:[#allocation2 + $0x130] sm:$0xf]
    %v153 = vld [vmem:[#allocation2 + $0x134] sm:$0xf]
    %v154 = vld [vmem:[#allocation2 + $0x138] sm:$0xf]
    %v155 = vld [vmem:[#allocation2 + $0x13c] sm:$0xf]
    %v156 = vld [vmem:[#allocation2 + $0x140] sm:$0xf]
    %v157 = vld [vmem:[#allocation2 + $0x144] sm:$0xf]
    %v158 = vld [vmem:[#allocation2 + $0x148] sm:$0xf]
    %v159 = vld [vmem:[#allocation2 + $0x14c] sm:$0xf]
    %v160 = vld [vmem:[#allocation2 + $0x150] sm:$0xf]
    %v161 = vld [vmem:[#allocation2 + $0x154] sm:$0xf]
    %v162 = vld [vmem:[#allocation2 + $0x158] sm:$0xf]
    %v163 = vld [vmem:[#allocation2 + $0x15c] sm:$0xf]
    %v164 = vld [vmem:[#allocation2 + $0x160] sm:$0xf]
    %v165 = vld [vmem:[#allocation2 + $0x164] sm:$0xf]
    %v166 = vld [vmem:[#allocation2 + $0x168] sm:$0xf]
    %v167 = vld [vmem:[#allocation2 + $0x16c] sm:$0xf]
    %v168 = vld [vmem:[#allocation2 + $0x170] sm:$0xf]
    %v169 = vld [vmem:[#allocation2 + $0x174] sm:$0xf]
    %v170 = vld [vmem:[#allocation2 + $0x178] sm:$0xf]
    %v171 = vld [vmem:[#allocation2 + $0x17c] sm:$0xf]
    %v172 = vld [vmem:[#allocation2 + $0x180] sm:$0xf]
    %v173 = vld [vmem:[#allocation2 + $0x184] sm:$0xf]
    %v174 = vld [vmem:[#allocation2 + $0x188] sm:$0xf]
    %v175 = vld [vmem:[#allocation2 + $0x18c] sm:$0xf]
    %v176 = vld [vmem:[#allocation2 + $0x190] sm:$0xf]
    %v177 = vld [vmem:[#allocation2 + $0x194] sm:$0xf]
    %v178 = vld [vmem:[#allocation2 + $0x198] sm:$0xf]
    %v179 = vld [vmem:[#allocation2 + $0x19c] sm:$0xf]
    %v180 = vld [vmem:[#allocation2 + $0x1a0] sm:$0xf]
    %v181 = vld [vmem:[#allocation2 + $0x1a4] sm:$0xf]
    %v182 = vld [vmem:[#allocation2 + $0x1a8] sm:$0xf]
    %v183 = vld [vmem:[#allocation2 + $0x1ac] sm:$0xf]
    %v184 = vld [vmem:[#allocation2 + $0x1b0] sm:$0xf]
    %v185 = vld [vmem:[#allocation2 + $0x1b4] sm:$0xf]
    %v186 = vld [vmem:[#allocation2 + $0x1b8] sm:$0xf]
    %v187 = vld [vmem:[#allocation2 + $0x1bc] sm:$0xf]
    %v188 = vld [vmem:[#allocation2 + $0x1c0] sm:$0xf]
    %v189 = vld [vmem:[#allocation2 + $0x1c4] sm:$0xf]
    %v190 = vld [vmem:[#allocation2 + $0x1c8] sm:$0xf]
    %v191 = vld [vmem:[#allocation2 + $0x1cc] sm:$0xf]
    %v192 = vld [vmem:[#allocation2 + $0x1d0] sm:$0xf]
    %v193 = vld [vmem:[#allocation2 + $0x1d4] sm:$0xf]
    %v194 = vld [vmem:[#allocation2 + $0x1d8] sm:$0xf]
    %v195 = vld [vmem:[#allocation2 + $0x1dc] sm:$0xf]
    %v196 = vld [vmem:[#allocation2 + $0x1e0] sm:$0xf]
    %v197 = vld [vmem:[#allocation2 + $0x1e4] sm:$0xf]
    %v198 = vld [vmem:[#allocation2 + $0x1e8] sm:$0xf]
    %v199 = vld [vmem:[#allocation2 + $0x1ec] sm:$0xf]
    %v200 = vld [vmem:[#allocation2 + $0x1f0] sm:$0xf]
    %v201 = vld [vmem:[#allocation2 + $0x1f4] sm:$0xf]
    %v202 = vld [vmem:[#allocation2 + $0x1f8] sm:$0xf]
    %v203 = vld [vmem:[#allocation2 + $0x1fc] sm:$0xf]
    %v204 = vld [vmem:[#allocation2 + $0x200] sm:$0xf]
    %v205 = vld [vmem:[#allocation2 + $0x204] sm:$0xf]
    %v206 = vld [vmem:[#allocation2 + $0x208] sm:$0xf]
    %v207 = vld [vmem:[#allocation2 + $0x20c] sm:$0xf]
    %v208 = vld [vmem:[#allocation2 + $0x210] sm:$0xf]
    %v209 = vld [vmem:[#allocation2 + $0x214] sm:$0xf]
    %v210 = vld [vmem:[#allocation2 + $0x218] sm:$0xf]
    %v211 = vld [vmem:[#allocation2 + $0x21c] sm:$0xf]
    %v212 = vld [vmem:[#allocation2 + $0x220] sm:$0xf]
    %v213 = vld [vmem:[#allocation2 + $0x224] sm:$0xf]
    %v214 = vld [vmem:[#allocation2 + $0x228] sm:$0xf]
    %v215 = vld [vmem:[#allocation2 + $0x22c] sm:$0xf]
    %v216 = vld [vmem:[#allocation2 + $0x230] sm:$0xf]
    %v217 = vld [vmem:[#allocation2 + $0x234] sm:$0xf]
    %v218 = vld [vmem:[#allocation2 + $0x238] sm:$0xf]
    %v219 = vld [vmem:[#allocation2 + $0x23c] sm:$0xf]
    %v220 = vld [vmem:[#allocation2 + $0x240] sm:$0xf]
    %v221 = vld [vmem:[#allocation2 + $0x244] sm:$0xf]
    %v222 = vld [vmem:[#allocation2 + $0x248] sm:$0xf]
    %v223 = vld [vmem:[#allocation2 + $0x24c] sm:$0xf]
    %v224 = vld [vmem:[#allocation2 + $0x250] sm:$0xf]
    %v225 = vld [vmem:[#allocation2 + $0x254] sm:$0xf]
    %v226 = vld [vmem:[#allocation2 + $0x258] sm:$0xf]
    %v227 = vld [vmem:[#allocation2 + $0x25c] sm:$0xf]
    %v228 = vld [vmem:[#allocation2 + $0x260] sm:$0xf]
    %v229 = vld [vmem:[#allocation2 + $0x264] sm:$0xf]
    %v230 = vld [vmem:[#allocation2 + $0x268] sm:$0xf]
    %v231 = vld [vmem:[#allocation2 + $0x26c] sm:$0xf]
    %v232 = vld [vmem:[#allocation2 + $0x270] sm:$0xf]
    %v233 = vld [vmem:[#allocation2 + $0x274] sm:$0xf]
    %v234 = vld [vmem:[#allocation2 + $0x278] sm:$0xf]
    %v235 = vld [vmem:[#allocation2 + $0x27c] sm:$0xf]
    %v236 = vld [vmem:[#allocation2 + $0x280] sm:$0xf]
    %v237 = vld [vmem:[#allocation2 + $0x284] sm:$0xf]
    %v238 = vld [vmem:[#allocation2 + $0x288] sm:$0xf]
    %v239 = vld [vmem:[#allocation2 + $0x28c] sm:$0xf]
    %v240 = vld [vmem:[#allocation2 + $0x290] sm:$0xf]
    %v241 = vld [vmem:[#allocation2 + $0x294] sm:$0xf]
    %v242 = vld [vmem:[#allocation2 + $0x298] sm:$0xf]
    %v243 = vld [vmem:[#allocation2 + $0x29c] sm:$0xf]
    %v244 = vld [vmem:[#allocation2 + $0x2a0] sm:$0xf]
    %v245 = vld [vmem:[#allocation2 + $0x2a4] sm:$0xf]
    %v246 = vld [vmem:[#allocation2 + $0x2a8] sm:$0xf]
    %v247 = vld [vmem:[#allocation2 + $0x2ac] sm:$0xf]
    %v248 = vld [vmem:[#allocation2 + $0x2b0] sm:$0xf]
    %v249 = vld [vmem:[#allocation2 + $0x2b4] sm:$0xf]
    %v250 = vld [vmem:[#allocation2 + $0x2b8] sm:$0xf]
    %v251 = vld [vmem:[#allocation2 + $0x2bc] sm:$0xf]
    %v252 = vld [vmem:[#allocation2 + $0x2c0] sm:$0xf]
    %v253 = vld [vmem:[#allocation2 + $0x2c4] sm:$0xf]
    %v254 = vld [vmem:[#allocation2 + $0x2c8] sm:$0xf]
    %v255 = vld [vmem:[#allocation2 + $0x2cc] sm:$0xf]
    %v256 = vld [vmem:[#allocation2 + $0x2d0] sm:$0xf]
    %v257 = vld [vmem:[#allocation2 + $0x2d4] sm:$0xf]
    %v258 = vld [vmem:[#allocation2 + $0x2d8] sm:$0xf]
    %v259 = vld [vmem:[#allocation2 + $0x2dc] sm:$0xf]
    %v260 = vld [vmem:[#allocation2 + $0x2e0] sm:$0xf]
    %v261 = vld [vmem:[#allocation2 + $0x2e4] sm:$0xf]
    %v262 = vld [vmem:[#allocation2 + $0x2e8] sm:$0xf]
    %v263 = vld [vmem:[#allocation2 + $0x2ec] sm:$0xf]
    %v264 = vld [vmem:[#allocation2 + $0x2f0] sm:$0xf]
    %v265 = vld [vmem:[#allocation2 + $0x2f4] sm:$0xf]
    %v266 = vld [vmem:[#allocation2 + $0x2f8] sm:$0xf]
    %v267 = vld [vmem:[#allocation2 + $0x2fc] sm:$0xf]
    %v268 = vld [vmem:[#allocation2 + $0x300] sm:$0xf]
    %v269 = vld [vmem:[#allocation2 + $0x304] sm:$0xf]
    %v270 = vld [vmem:[#allocation2 + $0x308] sm:$0xf]
    %v271 = vld [vmem:[#allocation2 + $0x30c] sm:$0xf]
    %v272 = vld [vmem:[#allocation2 + $0x310] sm:$0xf]
    %v273 = vld [vmem:[#allocation2 + $0x314] sm:$0xf]
    %v274 = vld [vmem:[#allocation2 + $0x318] sm:$0xf]
    %v275 = vld [vmem:[#allocation2 + $0x31c] sm:$0xf]
    %v276 = vld [vmem:[#allocation2 + $0x320] sm:$0xf]
    %v277 = vld [vmem:[#allocation2 + $0x324] sm:$0xf]
    %v278 = vld [vmem:[#allocation2 + $0x328] sm:$0xf]
    %v279 = vld [vmem:[#allocation2 + $0x32c] sm:$0xf]
    %v280 = vld [vmem:[#allocation2 + $0x330] sm:$0xf]
    %v281 = vld [vmem:[#allocation2 + $0x334] sm:$0xf]
    %v282 = vld [vmem:[#allocation2 + $0x338] sm:$0xf]
    %v283 = vld [vmem:[#allocation2 + $0x33c] sm:$0xf]
    %v284 = vld [vmem:[#allocation2 + $0x340] sm:$0xf]
    %v285 = vld [vmem:[#allocation2 + $0x344] sm:$0xf]
    %v286 = vld [vmem:[#allocation2 + $0x348] sm:$0xf]
    %v287 = vld [vmem:[#allocation2 + $0x34c] sm:$0xf]
    %v288 = vld [vmem:[#allocation2 + $0x350] sm:$0xf]
    %v289 = vld [vmem:[#allocation2 + $0x354] sm:$0xf]
    %v290 = vld [vmem:[#allocation2 + $0x358] sm:$0xf]
    %v291 = vld [vmem:[#allocation2 + $0x35c] sm:$0xf]
    %v292 = vld [vmem:[#allocation2 + $0x360] sm:$0xf]
    %v293 = vld [vmem:[#allocation2 + $0x364] sm:$0xf]
    %v294 = vld [vmem:[#allocation2 + $0x368] sm:$0xf]
    %v295 = vld [vmem:[#allocation2 + $0x36c] sm:$0xf]
    %v296 = vld [vmem:[#allocation2 + $0x370] sm:$0xf]
    %v297 = vld [vmem:[#allocation2 + $0x374] sm:$0xf]
    %v298 = vld [vmem:[#allocation2 + $0x378] sm:$0xf]
    %v299 = vld [vmem:[#allocation2 + $0x37c] sm:$0xf]
    %v300 = vld [vmem:[#allocation2 + $0x380] sm:$0xf]
    %v301 = vld [vmem:[#allocation2 + $0x384] sm:$0xf]
    %v302 = vld [vmem:[#allocation2 + $0x388] sm:$0xf]
    %v303 = vld [vmem:[#allocation2 + $0x38c] sm:$0xf]
    %v304 = vld [vmem:[#allocation2 + $0x390] sm:$0xf]
    %v305 = vld [vmem:[#allocation2 + $0x394] sm:$0xf]
    %v306 = vld [vmem:[#allocation2 + $0x398] sm:$0xf]
    %v307 = vld [vmem:[#allocation2 + $0x39c] sm:$0xf]
    %v308 = vld [vmem:[#allocation2 + $0x3a0] sm:$0xf]
    %v309 = vld [vmem:[#allocation2 + $0x3a4] sm:$0xf]
    %v310 = vld [vmem:[#allocation2 + $0x3a8] sm:$0xf]
    %v311 = vld [vmem:[#allocation2 + $0x3ac] sm:$0xf]
    %v312 = vld [vmem:[#allocation2 + $0x3b0] sm:$0xf]
    %v313 = vld [vmem:[#allocation2 + $0x3b4] sm:$0xf]
    %v314 = vld [vmem:[#allocation2 + $0x3b8] sm:$0xf]
    %v315 = vld [vmem:[#allocation2 + $0x3bc] sm:$0xf]
    %v316 = vld [vmem:[#allocation2 + $0x3c0] sm:$0xf]
    %v317 = vld [vmem:[#allocation2 + $0x3c4] sm:$0xf]
    %v318 = vld [vmem:[#allocation2 + $0x3c8] sm:$0xf]
    %v319 = vld [vmem:[#allocation2 + $0x3cc] sm:$0xf]
    %v320 = vld [vmem:[#allocation2 + $0x3d0] sm:$0xf]
    %v321 = vld [vmem:[#allocation2 + $0x3d4] sm:$0xf]
    %v322 = vld [vmem:[#allocation2 + $0x3d8] sm:$0xf]
    %v323 = vld [vmem:[#allocation2 + $0x3dc] sm:$0xf]
    %v324 = vld [vmem:[#allocation2 + $0x3e0] sm:$0xf]
    %v325 = vld [vmem:[#allocation2 + $0x3e4] sm:$0xf]
    %v326 = vld [vmem:[#allocation2 + $0x3e8] sm:$0xf]
    %v327 = vld [vmem:[#allocation2 + $0x3ec] sm:$0xf]
    %v328 = vld [vmem:[#allocation2 + $0x3f0] sm:$0xf]
    %v329 = vld [vmem:[#allocation2 + $0x3f4] sm:$0xf]
    %v330 = vld [vmem:[#allocation2 + $0x3f8] sm:$0xf]
    %v331 = vld [vmem:[#allocation2 + $0x3fc] sm:$0xf]
    %v332 = vld [vmem:[#allocation2 + $0x400] sm:$0xf]
    %v333 = vld [vmem:[#allocation2 + $0x404] sm:$0xf]
    %v334 = vld [vmem:[#allocation2 + $0x408] sm:$0xf]
    %v335 = vld [vmem:[#allocation2 + $0x40c] sm:$0xf]
    %v336 = vld [vmem:[#allocation2 + $0x410] sm:$0xf]
    %v337 = vld [vmem:[#allocation2 + $0x414] sm:$0xf]
    %v338 = vld [vmem:[#allocation2 + $0x418] sm:$0xf]
    %v339 = vld [vmem:[#allocation2 + $0x41c] sm:$0xf]
    %v340 = vld [vmem:[#allocation2 + $0x420] sm:$0xf]
    %v341 = vld [vmem:[#allocation2 + $0x424] sm:$0xf]
    %v342 = vld [vmem:[#allocation2 + $0x428] sm:$0xf]
    %v343 = vld [vmem:[#allocation2 + $0x42c] sm:$0xf]
    %v344 = vld [vmem:[#allocation2 + $0x430] sm:$0xf]
    %v345 = vld [vmem:[#allocation2 + $0x434] sm:$0xf]
    %v346 = vld [vmem:[#allocation2 + $0x438] sm:$0xf]
    %v347 = vld [vmem:[#allocation2 + $0x43c] sm:$0xf]
    %v348 = vld [vmem:[#allocation2 + $0x440] sm:$0xf]
    %v349 = vld [vmem:[#allocation2 + $0x444] sm:$0xf]
    %v350 = vld [vmem:[#allocation2 + $0x448] sm:$0xf]
    %v351 = vld [vmem:[#allocation2 + $0x44c] sm:$0xf]
    %v352 = vld [vmem:[#allocation2 + $0x450] sm:$0xf]
    %v353 = vld [vmem:[#allocation2 + $0x454] sm:$0xf]
    %v354 = vld [vmem:[#allocation2 + $0x458] sm:$0xf]
    %v355 = vld [vmem:[#allocation2 + $0x45c] sm:$0xf]
    %v356 = vld [vmem:[#allocation2 + $0x460] sm:$0xf]
    %v357 = vld [vmem:[#allocation2 + $0x464] sm:$0xf]
    %v358 = vld [vmem:[#allocation2 + $0x468] sm:$0xf]
    %v359 = vld [vmem:[#allocation2 + $0x46c] sm:$0xf]
    %v360 = vld [vmem:[#allocation2 + $0x470] sm:$0xf]
    %v361 = vld [vmem:[#allocation2 + $0x474] sm:$0xf]
    %v362 = vld [vmem:[#allocation2 + $0x478] sm:$0xf]
    %v363 = vld [vmem:[#allocation2 + $0x47c] sm:$0xf]
    %v364 = vld [vmem:[#allocation2 + $0x480] sm:$0xf]
    %v365 = vld [vmem:[#allocation2 + $0x484] sm:$0xf]
    %v366 = vld [vmem:[#allocation2 + $0x488] sm:$0xf]
    %v367 = vld [vmem:[#allocation2 + $0x48c] sm:$0xf]
    %v368 = vld [vmem:[#allocation2 + $0x490] sm:$0xf]
    %v369 = vld [vmem:[#allocation2 + $0x494] sm:$0xf]
    %v370 = vld [vmem:[#allocation2 + $0x498] sm:$0xf]
    %v371 = vld [vmem:[#allocation2 + $0x49c] sm:$0xf]
    %v372 = vld [vmem:[#allocation2 + $0x4a0] sm:$0xf]
    %v373 = vld [vmem:[#allocation2 + $0x4a4] sm:$0xf]
    %v374 = vld [vmem:[#allocation2 + $0x4a8] sm:$0xf]
    %v375 = vld [vmem:[#allocation2 + $0x4ac] sm:$0xf]
    %v376 = vld [vmem:[#allocation2 + $0x4b0] sm:$0xf]
    %v377 = vld [vmem:[#allocation2 + $0x4b4] sm:$0xf]
    %v378 = vld [vmem:[#allocation2 + $0x4b8] sm:$0xf]
    %v379 = vld [vmem:[#allocation2 + $0x4bc] sm:$0xf]
    %v380 = vld [vmem:[#allocation2 + $0x4c0] sm:$0xf]
    %v381 = vld [vmem:[#allocation2 + $0x4c4] sm:$0xf]
    %v382 = vld [vmem:[#allocation2 + $0x4c8] sm:$0xf]
    %v383 = vld [vmem:[#allocation2 + $0x4cc] sm:$0xf]
    %v384 = vld [vmem:[#allocation2 + $0x4d0] sm:$0xf]
    %v385 = vld [vmem:[#allocation2 + $0x4d4] sm:$0xf]
    %v386 = vld [vmem:[#allocation2 + $0x4d8] sm:$0xf]
    %v387 = vld [vmem:[#allocation2 + $0x4dc] sm:$0xf]
    %v388 = vld [vmem:[#allocation2 + $0x4e0] sm:$0xf]
    %v389 = vld [vmem:[#allocation2 + $0x4e4] sm:$0xf]
    %v390 = vld [vmem:[#allocation2 + $0x4e8] sm:$0xf]
    %v391 = vld [vmem:[#allocation2 + $0x4ec] sm:$0xf]
    %v392 = vld [vmem:[#allocation2 + $0x4f0] sm:$0xf]
    %v393 = vld [vmem:[#allocation2 + $0x4f4] sm:$0xf]
    %v394 = vld [vmem:[#allocation2 + $0x4f8] sm:$0xf]
    %v395 = vld [vmem:[#allocation2 + $0x4fc] sm:$0xf]
    %v396 = vld [vmem:[#allocation2 + $0x500] sm:$0xf]
    %v397 = vld [vmem:[#allocation2 + $0x504] sm:$0xf]
    %v398 = vld [vmem:[#allocation2 + $0x508] sm:$0xf]
    %v399 = vld [vmem:[#allocation2 + $0x50c] sm:$0xf]
    %v400 = vld [vmem:[#allocation2 + $0x510] sm:$0xf]
    %v401 = vld [vmem:[#allocation2 + $0x514] sm:$0xf]
    %v402 = vld [vmem:[#allocation2 + $0x518] sm:$0xf]
    %v403 = vld [vmem:[#allocation2 + $0x51c] sm:$0xf]
    %v404 = vld [vmem:[#allocation2 + $0x520] sm:$0xf]
    %v405 = vld [vmem:[#allocation2 + $0x524] sm:$0xf]
    %v406 = vld [vmem:[#allocation2 + $0x528] sm:$0xf]
    %v407 = vld [vmem:[#allocation2 + $0x52c] sm:$0xf]
    %v408 = vld [vmem:[#allocation2 + $0x530] sm:$0xf]
    %v409 = vld [vmem:[#allocation2 + $0x534] sm:$0xf]
    %v410 = vld [vmem:[#allocation2 + $0x538] sm:$0xf]
    %v411 = vld [vmem:[#allocation2 + $0x53c] sm:$0xf]
    %v412 = vld [vmem:[#allocation2 + $0x540] sm:$0xf]
    %v413 = vld [vmem:[#allocation2 + $0x544] sm:$0xf]
    %v414 = vld [vmem:[#allocation2 + $0x548] sm:$0xf]
    %v415 = vld [vmem:[#allocation2 + $0x54c] sm:$0xf]
    %v416 = vld [vmem:[#allocation2 + $0x550] sm:$0xf]
    %v417 = vld [vmem:[#allocation2 + $0x554] sm:$0xf]
    %v418 = vld [vmem:[#allocation2 + $0x558] sm:$0xf]
    %v419 = vld [vmem:[#allocation2 + $0x55c] sm:$0xf]
    %v420 = vld [vmem:[#allocation2 + $0x560] sm:$0xf]
    %v421 = vld [vmem:[#allocation2 + $0x564] sm:$0xf]
    %v422 = vld [vmem:[#allocation2 + $0x568] sm:$0xf]
    %v423 = vld [vmem:[#allocation2 + $0x56c] sm:$0xf]
    %v424 = vld [vmem:[#allocation2 + $0x570] sm:$0xf]
    %v425 = vld [vmem:[#allocation2 + $0x574] sm:$0xf]
    %v426 = vld [vmem:[#allocation2 + $0x578] sm:$0xf]
    %v427 = vld [vmem:[#allocation2 + $0x57c] sm:$0xf]
    %v428 = vld [vmem:[#allocation2 + $0x580] sm:$0xf]
    %v429 = vld [vmem:[#allocation2 + $0x584] sm:$0xf]
    %v430 = vld [vmem:[#allocation2 + $0x588] sm:$0xf]
    %v431 = vld [vmem:[#allocation2 + $0x58c] sm:$0xf]
    %v432 = vld [vmem:[#allocation2 + $0x590] sm:$0xf]
    %v433 = vld [vmem:[#allocation2 + $0x594] sm:$0xf]
    %v434 = vld [vmem:[#allocation2 + $0x598] sm:$0xf]
    %v435 = vld [vmem:[#allocation2 + $0x59c] sm:$0xf]
    %v436 = vld [vmem:[#allocation2 + $0x5a0] sm:$0xf]
    %v437 = vld [vmem:[#allocation2 + $0x5a4] sm:$0xf]
    %v438 = vld [vmem:[#allocation2 + $0x5a8] sm:$0xf]
    %v439 = vld [vmem:[#allocation2 + $0x5ac] sm:$0xf]
    %v440 = vld [vmem:[#allocation2 + $0x5b0] sm:$0xf]
    %v441 = vld [vmem:[#allocation2 + $0x5b4] sm:$0xf]
    %v442 = vld [vmem:[#allocation2 + $0x5b8] sm:$0xf]
    %v443 = vld [vmem:[#allocation2 + $0x5bc] sm:$0xf]
    %v444 = vld [vmem:[#allocation2 + $0x5c0] sm:$0xf]
    %v445 = vld [vmem:[#allocation2 + $0x5c4] sm:$0xf]
    %v446 = vld [vmem:[#allocation2 + $0x5c8] sm:$0xf]
    %v447 = vld [vmem:[#allocation2 + $0x5cc] sm:$0xf]
    %v448 = vld [vmem:[#allocation2 + $0x5d0] sm:$0xf]
    %v449 = vld [vmem:[#allocation2 + $0x5d4] sm:$0xf]
    %v450 = vld [vmem:[#allocation2 + $0x5d8] sm:$0xf]
    %v451 = vld [vmem:[#allocation2 + $0x5dc] sm:$0xf]
    %v452 = vld [vmem:[#allocation2 + $0x5e0] sm:$0xf]
    %v453 = vld [vmem:[#allocation2 + $0x5e4] sm:$0xf]
    %v454 = vld [vmem:[#allocation2 + $0x5e8] sm:$0xf]
    %v455 = vld [vmem:[#allocation2 + $0x5ec] sm:$0xf]
    %v456 = vld [vmem:[#allocation2 + $0x5f0] sm:$0xf]
    %v457 = vld [vmem:[#allocation2 + $0x5f4] sm:$0xf]
    %v458 = vld [vmem:[#allocation2 + $0x5f8] sm:$0xf]
    %v459 = vld [vmem:[#allocation2 + $0x5fc] sm:$0xf]
    %v460 = vunpack.c.l.bf16 %v76
    %v461 = vunpack.c.l.bf16 %v77
    %v462 = vunpack.c.l.bf16 %v78
    %v463 = vunpack.c.l.bf16 %v79
    %v464 = vunpack.c.l.bf16 %v80
    %v465 = vunpack.c.l.bf16 %v81
    %v466 = vunpack.c.l.bf16 %v82
    %v467 = vunpack.c.l.bf16 %v83
    %v468 = vunpack.c.l.bf16 %v84
    %v469 = vunpack.c.l.bf16 %v85
    %v470 = vunpack.c.l.bf16 %v86
    %v471 = vunpack.c.l.bf16 %v87
    %v472 = vunpack.c.l.bf16 %v88
    %v473 = vunpack.c.l.bf16 %v89
    %v474 = vunpack.c.l.bf16 %v90
    %v475 = vunpack.c.l.bf16 %v91
    %v476 = vunpack.c.l.bf16 %v92
    %v477 = vunpack.c.l.bf16 %v93
    %v478 = vunpack.c.l.bf16 %v94
    %v479 = vunpack.c.l.bf16 %v95
    %v480 = vunpack.c.l.bf16 %v96
    %v481 = vunpack.c.l.bf16 %v97
    %v482 = vunpack.c.l.bf16 %v98
    %v483 = vunpack.c.l.bf16 %v99
    %v484 = vunpack.c.l.bf16 %v100
    %v485 = vunpack.c.l.bf16 %v101
    %v486 = vunpack.c.l.bf16 %v102
    %v487 = vunpack.c.l.bf16 %v103
    %v488 = vunpack.c.l.bf16 %v104
    %v489 = vunpack.c.l.bf16 %v105
    %v490 = vunpack.c.l.bf16 %v106
    %v491 = vunpack.c.l.bf16 %v107
    %v492 = vunpack.c.l.bf16 %v108
    %v493 = vunpack.c.l.bf16 %v109
    %v494 = vunpack.c.l.bf16 %v110
    %v495 = vunpack.c.l.bf16 %v111
    %v496 = vunpack.c.l.bf16 %v112
    %v497 = vunpack.c.l.bf16 %v113
    %v498 = vunpack.c.l.bf16 %v114
    %v499 = vunpack.c.l.bf16 %v115
    %v500 = vunpack.c.l.bf16 %v116
    %v501 = vunpack.c.l.bf16 %v117
    %v502 = vunpack.c.l.bf16 %v118
    %v503 = vunpack.c.l.bf16 %v119
    %v504 = vunpack.c.l.bf16 %v120
    %v505 = vunpack.c.l.bf16 %v121
    %v506 = vunpack.c.l.bf16 %v122
    %v507 = vunpack.c.l.bf16 %v123
    %v508 = vunpack.c.l.bf16 %v124
    %v509 = vunpack.c.l.bf16 %v125
    %v510 = vunpack.c.l.bf16 %v126
    %v511 = vunpack.c.l.bf16 %v127
    %v512 = vunpack.c.l.bf16 %v128
    %v513 = vunpack.c.l.bf16 %v129
    %v514 = vunpack.c.l.bf16 %v130
    %v515 = vunpack.c.l.bf16 %v131
    %v516 = vunpack.c.l.bf16 %v132
    %v517 = vunpack.c.l.bf16 %v133
    %v518 = vunpack.c.l.bf16 %v134
    %v519 = vunpack.c.l.bf16 %v135
    %v520 = vunpack.c.l.bf16 %v136
    %v521 = vunpack.c.l.bf16 %v137
    %v522 = vunpack.c.l.bf16 %v138
    %v523 = vunpack.c.l.bf16 %v139
    %v524 = vunpack.c.l.bf16 %v140
    %v525 = vunpack.c.l.bf16 %v141
    %v526 = vunpack.c.l.bf16 %v142
    %v527 = vunpack.c.l.bf16 %v143
    %v528 = vunpack.c.l.bf16 %v144
    %v529 = vunpack.c.l.bf16 %v145
    %v530 = vunpack.c.l.bf16 %v146
    %v531 = vunpack.c.l.bf16 %v147
    %v532 = vunpack.c.l.bf16 %v148
    %v533 = vunpack.c.l.bf16 %v149
    %v534 = vunpack.c.l.bf16 %v150
    %v535 = vunpack.c.l.bf16 %v151
    %v536 = vunpack.c.l.bf16 %v152
    %v537 = vunpack.c.l.bf16 %v153
    %v538 = vunpack.c.l.bf16 %v154
    %v539 = vunpack.c.l.bf16 %v155
    %v540 = vunpack.c.l.bf16 %v156
    %v541 = vunpack.c.l.bf16 %v157
    %v542 = vunpack.c.l.bf16 %v158
    %v543 = vunpack.c.l.bf16 %v159
    %v544 = vunpack.c.l.bf16 %v160
    %v545 = vunpack.c.l.bf16 %v161
    %v546 = vunpack.c.l.bf16 %v162
    %v547 = vunpack.c.l.bf16 %v163
    %v548 = vunpack.c.l.bf16 %v164
    %v549 = vunpack.c.l.bf16 %v165
    %v550 = vunpack.c.l.bf16 %v166
    %v551 = vunpack.c.l.bf16 %v167
    %v552 = vunpack.c.l.bf16 %v168
    %v553 = vunpack.c.l.bf16 %v169
    %v554 = vunpack.c.l.bf16 %v170
    %v555 = vunpack.c.l.bf16 %v171
    %v556 = vunpack.c.l.bf16 %v172
    %v557 = vunpack.c.l.bf16 %v173
    %v558 = vunpack.c.l.bf16 %v174
    %v559 = vunpack.c.l.bf16 %v175
    %v560 = vunpack.c.l.bf16 %v176
    %v561 = vunpack.c.l.bf16 %v177
    %v562 = vunpack.c.l.bf16 %v178
    %v563 = vunpack.c.l.bf16 %v179
    %v564 = vunpack.c.l.bf16 %v180
    %v565 = vunpack.c.l.bf16 %v181
    %v566 = vunpack.c.l.bf16 %v182
    %v567 = vunpack.c.l.bf16 %v183
    %v568 = vunpack.c.l.bf16 %v184
    %v569 = vunpack.c.l.bf16 %v185
    %v570 = vunpack.c.l.bf16 %v186
    %v571 = vunpack.c.l.bf16 %v187
    %v572 = vunpack.c.l.bf16 %v188
    %v573 = vunpack.c.l.bf16 %v189
    %v574 = vunpack.c.l.bf16 %v190
    %v575 = vunpack.c.l.bf16 %v191
    %v576 = vunpack.c.l.bf16 %v192
    %v577 = vunpack.c.l.bf16 %v193
    %v578 = vunpack.c.l.bf16 %v194
    %v579 = vunpack.c.l.bf16 %v195
    %v580 = vunpack.c.l.bf16 %v196
    %v581 = vunpack.c.l.bf16 %v197
    %v582 = vunpack.c.l.bf16 %v198
    %v583 = vunpack.c.l.bf16 %v199
    %v584 = vunpack.c.l.bf16 %v200
    %v585 = vunpack.c.l.bf16 %v201
    %v586 = vunpack.c.l.bf16 %v202
    %v587 = vunpack.c.l.bf16 %v203
    %v588 = vunpack.c.l.bf16 %v204
    %v589 = vunpack.c.l.bf16 %v205
    %v590 = vunpack.c.l.bf16 %v206
    %v591 = vunpack.c.l.bf16 %v207
    %v592 = vunpack.c.l.bf16 %v208
    %v593 = vunpack.c.l.bf16 %v209
    %v594 = vunpack.c.l.bf16 %v210
    %v595 = vunpack.c.l.bf16 %v211
    %v596 = vunpack.c.l.bf16 %v212
    %v597 = vunpack.c.l.bf16 %v213
    %v598 = vunpack.c.l.bf16 %v214
    %v599 = vunpack.c.l.bf16 %v215
    %v600 = vunpack.c.l.bf16 %v216
    %v601 = vunpack.c.l.bf16 %v217
    %v602 = vunpack.c.l.bf16 %v218
    %v603 = vunpack.c.l.bf16 %v219
    %v604 = vunpack.c.l.bf16 %v220
    %v605 = vunpack.c.l.bf16 %v221
    %v606 = vunpack.c.l.bf16 %v222
    %v607 = vunpack.c.l.bf16 %v223
    %v608 = vunpack.c.l.bf16 %v224
    %v609 = vunpack.c.l.bf16 %v225
    %v610 = vunpack.c.l.bf16 %v226
    %v611 = vunpack.c.l.bf16 %v227
    %v612 = vunpack.c.l.bf16 %v228
    %v613 = vunpack.c.l.bf16 %v229
    %v614 = vunpack.c.l.bf16 %v230
    %v615 = vunpack.c.l.bf16 %v231
    %v616 = vunpack.c.l.bf16 %v232
    %v617 = vunpack.c.l.bf16 %v233
    %v618 = vunpack.c.l.bf16 %v234
    %v619 = vunpack.c.l.bf16 %v235
    %v620 = vunpack.c.l.bf16 %v236
    %v621 = vunpack.c.l.bf16 %v237
    %v622 = vunpack.c.l.bf16 %v238
    %v623 = vunpack.c.l.bf16 %v239
    %v624 = vunpack.c.l.bf16 %v240
    %v625 = vunpack.c.l.bf16 %v241
    %v626 = vunpack.c.l.bf16 %v242
    %v627 = vunpack.c.l.bf16 %v243
    %v628 = vunpack.c.l.bf16 %v244
    %v629 = vunpack.c.l.bf16 %v245
    %v630 = vunpack.c.l.bf16 %v246
    %v631 = vunpack.c.l.bf16 %v247
    %v632 = vunpack.c.l.bf16 %v248
    %v633 = vunpack.c.l.bf16 %v249
    %v634 = vunpack.c.l.bf16 %v250
    %v635 = vunpack.c.l.bf16 %v251
    %v636 = vunpack.c.l.bf16 %v252
    %v637 = vunpack.c.l.bf16 %v253
    %v638 = vunpack.c.l.bf16 %v254
    %v639 = vunpack.c.l.bf16 %v255
    %v640 = vunpack.c.l.bf16 %v256
    %v641 = vunpack.c.l.bf16 %v257
    %v642 = vunpack.c.l.bf16 %v258
    %v643 = vunpack.c.l.bf16 %v259
    %v644 = vunpack.c.l.bf16 %v260
    %v645 = vunpack.c.l.bf16 %v261
    %v646 = vunpack.c.l.bf16 %v262
    %v647 = vunpack.c.l.bf16 %v263
    %v648 = vunpack.c.l.bf16 %v264
    %v649 = vunpack.c.l.bf16 %v265
    %v650 = vunpack.c.l.bf16 %v266
    %v651 = vunpack.c.l.bf16 %v267
    %v652 = vunpack.c.l.bf16 %v268
    %v653 = vunpack.c.l.bf16 %v269
    %v654 = vunpack.c.l.bf16 %v270
    %v655 = vunpack.c.l.bf16 %v271
    %v656 = vunpack.c.l.bf16 %v272
    %v657 = vunpack.c.l.bf16 %v273
    %v658 = vunpack.c.l.bf16 %v274
    %v659 = vunpack.c.l.bf16 %v275
    %v660 = vunpack.c.l.bf16 %v276
    %v661 = vunpack.c.l.bf16 %v277
    %v662 = vunpack.c.l.bf16 %v278
    %v663 = vunpack.c.l.bf16 %v279
    %v664 = vunpack.c.l.bf16 %v280
    %v665 = vunpack.c.l.bf16 %v281
    %v666 = vunpack.c.l.bf16 %v282
    %v667 = vunpack.c.l.bf16 %v283
    %v668 = vunpack.c.l.bf16 %v284
    %v669 = vunpack.c.l.bf16 %v285
    %v670 = vunpack.c.l.bf16 %v286
    %v671 = vunpack.c.l.bf16 %v287
    %v672 = vunpack.c.l.bf16 %v288
    %v673 = vunpack.c.l.bf16 %v289
    %v674 = vunpack.c.l.bf16 %v290
    %v675 = vunpack.c.l.bf16 %v291
    %v676 = vunpack.c.l.bf16 %v292
    %v677 = vunpack.c.l.bf16 %v293
    %v678 = vunpack.c.l.bf16 %v294
    %v679 = vunpack.c.l.bf16 %v295
    %v680 = vunpack.c.l.bf16 %v296
    %v681 = vunpack.c.l.bf16 %v297
    %v682 = vunpack.c.l.bf16 %v298
    %v683 = vunpack.c.l.bf16 %v299
    %v684 = vunpack.c.l.bf16 %v300
    %v685 = vunpack.c.l.bf16 %v301
    %v686 = vunpack.c.l.bf16 %v302
    %v687 = vunpack.c.l.bf16 %v303
    %v688 = vunpack.c.l.bf16 %v304
    %v689 = vunpack.c.l.bf16 %v305
    %v690 = vunpack.c.l.bf16 %v306
    %v691 = vunpack.c.l.bf16 %v307
    %v692 = vunpack.c.l.bf16 %v308
    %v693 = vunpack.c.l.bf16 %v309
    %v694 = vunpack.c.l.bf16 %v310
    %v695 = vunpack.c.l.bf16 %v311
    %v696 = vunpack.c.l.bf16 %v312
    %v697 = vunpack.c.l.bf16 %v313
    %v698 = vunpack.c.l.bf16 %v314
    %v699 = vunpack.c.l.bf16 %v315
    %v700 = vunpack.c.l.bf16 %v316
    %v701 = vunpack.c.l.bf16 %v317
    %v702 = vunpack.c.l.bf16 %v318
    %v703 = vunpack.c.l.bf16 %v319
    %v704 = vunpack.c.l.bf16 %v320
    %v705 = vunpack.c.l.bf16 %v321
    %v706 = vunpack.c.l.bf16 %v322
    %v707 = vunpack.c.l.bf16 %v323
    %v708 = vunpack.c.l.bf16 %v324
    %v709 = vunpack.c.l.bf16 %v325
    %v710 = vunpack.c.l.bf16 %v326
    %v711 = vunpack.c.l.bf16 %v327
    %v712 = vunpack.c.l.bf16 %v328
    %v713 = vunpack.c.l.bf16 %v329
    %v714 = vunpack.c.l.bf16 %v330
    %v715 = vunpack.c.l.bf16 %v331
    %v716 = vunpack.c.l.bf16 %v332
    %v717 = vunpack.c.l.bf16 %v333
    %v718 = vunpack.c.l.bf16 %v334
    %v719 = vunpack.c.l.bf16 %v335
    %v720 = vunpack.c.l.bf16 %v336
    %v721 = vunpack.c.l.bf16 %v337
    %v722 = vunpack.c.l.bf16 %v338
    %v723 = vunpack.c.l.bf16 %v339
    %v724 = vunpack.c.l.bf16 %v340
    %v725 = vunpack.c.l.bf16 %v341
    %v726 = vunpack.c.l.bf16 %v342
    %v727 = vunpack.c.l.bf16 %v343
    %v728 = vunpack.c.l.bf16 %v344
    %v729 = vunpack.c.l.bf16 %v345
    %v730 = vunpack.c.l.bf16 %v346
    %v731 = vunpack.c.l.bf16 %v347
    %v732 = vunpack.c.l.bf16 %v348
    %v733 = vunpack.c.l.bf16 %v349
    %v734 = vunpack.c.l.bf16 %v350
    %v735 = vunpack.c.l.bf16 %v351
    %v736 = vunpack.c.l.bf16 %v352
    %v737 = vunpack.c.l.bf16 %v353
    %v738 = vunpack.c.l.bf16 %v354
    %v739 = vunpack.c.l.bf16 %v355
    %v740 = vunpack.c.l.bf16 %v356
    %v741 = vunpack.c.l.bf16 %v357
    %v742 = vunpack.c.l.bf16 %v358
    %v743 = vunpack.c.l.bf16 %v359
    %v744 = vunpack.c.l.bf16 %v360
    %v745 = vunpack.c.l.bf16 %v361
    %v746 = vunpack.c.l.bf16 %v362
    %v747 = vunpack.c.l.bf16 %v363
    %v748 = vunpack.c.l.bf16 %v364
    %v749 = vunpack.c.l.bf16 %v365
    %v750 = vunpack.c.l.bf16 %v366
    %v751 = vunpack.c.l.bf16 %v367
    %v752 = vunpack.c.l.bf16 %v368
    %v753 = vunpack.c.l.bf16 %v369
    %v754 = vunpack.c.l.bf16 %v370
    %v755 = vunpack.c.l.bf16 %v371
    %v756 = vunpack.c.l.bf16 %v372
    %v757 = vunpack.c.l.bf16 %v373
    %v758 = vunpack.c.l.bf16 %v374
    %v759 = vunpack.c.l.bf16 %v375
    %v760 = vunpack.c.l.bf16 %v376
    %v761 = vunpack.c.l.bf16 %v377
    %v762 = vunpack.c.l.bf16 %v378
    %v763 = vunpack.c.l.bf16 %v379
    %v764 = vunpack.c.l.bf16 %v380
    %v765 = vunpack.c.l.bf16 %v381
    %v766 = vunpack.c.l.bf16 %v382
    %v767 = vunpack.c.l.bf16 %v383
    %v768 = vunpack.c.l.bf16 %v384
    %v769 = vunpack.c.l.bf16 %v385
    %v770 = vunpack.c.l.bf16 %v386
    %v771 = vunpack.c.l.bf16 %v387
    %v772 = vunpack.c.l.bf16 %v388
    %v773 = vunpack.c.l.bf16 %v389
    %v774 = vunpack.c.l.bf16 %v390
    %v775 = vunpack.c.l.bf16 %v391
    %v776 = vunpack.c.l.bf16 %v392
    %v777 = vunpack.c.l.bf16 %v393
    %v778 = vunpack.c.l.bf16 %v394
    %v779 = vunpack.c.l.bf16 %v395
    %v780 = vunpack.c.l.bf16 %v396
    %v781 = vunpack.c.l.bf16 %v397
    %v782 = vunpack.c.l.bf16 %v398
    %v783 = vunpack.c.l.bf16 %v399
    %v784 = vunpack.c.l.bf16 %v400
    %v785 = vunpack.c.l.bf16 %v401
    %v786 = vunpack.c.l.bf16 %v402
    %v787 = vunpack.c.l.bf16 %v403
    %v788 = vunpack.c.l.bf16 %v404
    %v789 = vunpack.c.l.bf16 %v405
    %v790 = vunpack.c.l.bf16 %v406
    %v791 = vunpack.c.l.bf16 %v407
    %v792 = vunpack.c.l.bf16 %v408
    %v793 = vunpack.c.l.bf16 %v409
    %v794 = vunpack.c.l.bf16 %v410
    %v795 = vunpack.c.l.bf16 %v411
    %v796 = vunpack.c.l.bf16 %v412
    %v797 = vunpack.c.l.bf16 %v413
    %v798 = vunpack.c.l.bf16 %v414
    %v799 = vunpack.c.l.bf16 %v415
    %v800 = vunpack.c.l.bf16 %v416
    %v801 = vunpack.c.l.bf16 %v417
    %v802 = vunpack.c.l.bf16 %v418
    %v803 = vunpack.c.l.bf16 %v419
    %v804 = vunpack.c.l.bf16 %v420
    %v805 = vunpack.c.l.bf16 %v421
    %v806 = vunpack.c.l.bf16 %v422
    %v807 = vunpack.c.l.bf16 %v423
    %v808 = vunpack.c.l.bf16 %v424
    %v809 = vunpack.c.l.bf16 %v425
    %v810 = vunpack.c.l.bf16 %v426
    %v811 = vunpack.c.l.bf16 %v427
    %v812 = vunpack.c.l.bf16 %v428
    %v813 = vunpack.c.l.bf16 %v429
    %v814 = vunpack.c.l.bf16 %v430
    %v815 = vunpack.c.l.bf16 %v431
    %v816 = vunpack.c.l.bf16 %v432
    %v817 = vunpack.c.l.bf16 %v433
    %v818 = vunpack.c.l.bf16 %v434
    %v819 = vunpack.c.l.bf16 %v435
    %v820 = vunpack.c.l.bf16 %v436
    %v821 = vunpack.c.l.bf16 %v437
    %v822 = vunpack.c.l.bf16 %v438
    %v823 = vunpack.c.l.bf16 %v439
    %v824 = vunpack.c.l.bf16 %v440
    %v825 = vunpack.c.l.bf16 %v441
    %v826 = vunpack.c.l.bf16 %v442
    %v827 = vunpack.c.l.bf16 %v443
    %v828 = vunpack.c.l.bf16 %v444
    %v829 = vunpack.c.l.bf16 %v445
    %v830 = vunpack.c.l.bf16 %v446
    %v831 = vunpack.c.l.bf16 %v447
    %v832 = vunpack.c.l.bf16 %v448
    %v833 = vunpack.c.l.bf16 %v449
    %v834 = vunpack.c.l.bf16 %v450
    %v835 = vunpack.c.l.bf16 %v451
    %v836 = vunpack.c.l.bf16 %v452
    %v837 = vunpack.c.l.bf16 %v453
    %v838 = vunpack.c.l.bf16 %v454
    %v839 = vunpack.c.l.bf16 %v455
    %v840 = vunpack.c.l.bf16 %v456
    %v841 = vunpack.c.l.bf16 %v457
    %v842 = vunpack.c.l.bf16 %v458
    %v843 = vunpack.c.l.bf16 %v459
    %v844 = vld [vmem:[%s2] sm:$0x1]
    %v846 = vlaneseq
    %v847 = vshrl.u32 %v846, 7
    %v848 = vsub.s32 0, %v847
    %v849 = vrot.slane %v844, %v848
    %851 = vmatprep.subr.mxu0 0.0
    %852 = vmatpush1.msra.mxu0 %v460
    %853 = vmatprep.subr.mxu0 0.0
    %854 = vmatpush1.msra.mxu0 %v461
    %855 = vmatprep.subr.mxu0 0.0
    %856 = vmatpush1.msra.mxu0 %v462
    %857 = vmatprep.subr.mxu0 0.0
    %858 = vmatpush1.msra.mxu0 %v463
    %859 = vmatprep.subr.mxu0 0.0
    %860 = vmatpush1.msra.mxu0 %v464
    %861 = vmatprep.subr.mxu0 0.0
    %862 = vmatpush1.msra.mxu0 %v465
    %863 = vmatprep.subr.mxu0 0.0
    %864 = vmatpush1.msra.mxu0 %v466
    %865 = vmatprep.subr.mxu0 0.0
    %866 = vmatpush1.msra.mxu0 %v467
    %867 = vmatprep.subr.mxu0 0.0
    %868 = vmatpush1.msra.mxu0 %v468
    %869 = vmatprep.subr.mxu0 0.0
    %870 = vmatpush1.msra.mxu0 %v469
    %871 = vmatprep.subr.mxu0 0.0
    %872 = vmatpush1.msra.mxu0 %v470
    %873 = vmatprep.subr.mxu0 0.0
    %874 = vmatpush1.msra.mxu0 %v471
    %875 = vmatprep.subr.mxu0 0.0
    %876 = vmatpush1.msra.mxu0 %v472
    %877 = vmatprep.subr.mxu0 0.0
    %878 = vmatpush1.msra.mxu0 %v473
    %879 = vmatprep.subr.mxu0 0.0
    %880 = vmatpush1.msra.mxu0 %v474
    %881 = vmatprep.subr.mxu0 0.0
    %882 = vmatpush1.msra.mxu0 %v475
    %883 = vmatprep.subr.mxu0 0.0
    %884 = vmatpush1.msra.mxu0 %v476
    %885 = vmatprep.subr.mxu0 0.0
    %886 = vmatpush1.msra.mxu0 %v477
    %887 = vmatprep.subr.mxu0 0.0
    %888 = vmatpush1.msra.mxu0 %v478
    %889 = vmatprep.subr.mxu0 0.0
    %890 = vmatpush1.msra.mxu0 %v479
    %891 = vmatprep.subr.mxu0 0.0
    %892 = vmatpush1.msra.mxu0 %v480
    %893 = vmatprep.subr.mxu0 0.0
    %894 = vmatpush1.msra.mxu0 %v481
    %895 = vmatprep.subr.mxu0 0.0
    %896 = vmatpush1.msra.mxu0 %v482
    %897 = vmatprep.subr.mxu0 0.0
    %898 = vmatpush1.msra.mxu0 %v483
    %899 = vmatprep.subr.mxu0 0.0
    %900 = vmatpush1.msra.mxu0 %v484
    %901 = vmatprep.subr.mxu0 0.0
    %902 = vmatpush1.msra.mxu0 %v485
    %903 = vmatprep.subr.mxu0 0.0
    %904 = vmatpush1.msra.mxu0 %v486
    %905 = vmatprep.subr.mxu0 0.0
    %906 = vmatpush1.msra.mxu0 %v487
    %907 = vmatprep.subr.mxu0 0.0
    %908 = vmatpush1.msra.mxu0 %v488
    %909 = vmatprep.subr.mxu0 0.0
    %910 = vmatpush1.msra.mxu0 %v489
    %911 = vmatprep.subr.mxu0 0.0
    %912 = vmatpush1.msra.mxu0 %v490
    %913 = vmatprep.subr.mxu0 0.0
    %914 = vmatpush1.msra.mxu0 %v491
    %915 = vmatprep.mubr.f32.mxu0 %v29
    %916 = vmatmul.mubr.f32.gmra.mrb[0].mxu0 %v28
    %v917 = vpop.f32.mrb[0].mxu0
    %v918 = vadd.f32 %v849, %v917
    %v919 = vpop.f32.mrb[0].mxu0
    %920 = vmatprep.mubr.f32.mxu0 %v53
    %921 = vmatmul.mubr.f32.gmra.mrb[0].mxu0 %v52
    %v922 = vpop.f32.mrb[0].mxu0
    %v923 = vadd.f32 %v849, %v922
    %v924 = vpop.f32.mrb[0].mxu0
    %925 = vdwg.mxu0
    %926 = vmatprep.subr.mxu0 0.0
    %927 = vmatpush1.msra.mxu0 %v492
    %928 = vmatprep.subr.mxu0 0.0
    %929 = vmatpush1.msra.mxu0 %v493
    %930 = vmatprep.subr.mxu0 0.0
    %931 = vmatpush1.msra.mxu0 %v494
    %932 = vmatprep.subr.mxu0 0.0
    %933 = vmatpush1.msra.mxu0 %v495
    %934 = vmatprep.subr.mxu0 0.0
    %935 = vmatpush1.msra.mxu0 %v496
    %936 = vmatprep.subr.mxu0 0.0
    %937 = vmatpush1.msra.mxu0 %v497
    %938 = vmatprep.subr.mxu0 0.0
    %939 = vmatpush1.msra.mxu0 %v498
    %940 = vmatprep.subr.mxu0 0.0
    %941 = vmatpush1.msra.mxu0 %v499
    %942 = vmatprep.subr.mxu0 0.0
    %943 = vmatpush1.msra.mxu0 %v500
    %944 = vmatprep.subr.mxu0 0.0
    %945 = vmatpush1.msra.mxu0 %v501
    %946 = vmatprep.subr.mxu0 0.0
    %947 = vmatpush1.msra.mxu0 %v502
    %948 = vmatprep.subr.mxu0 0.0
    %949 = vmatpush1.msra.mxu0 %v503
    %950 = vmatprep.subr.mxu0 0.0
    %951 = vmatpush1.msra.mxu0 %v504
    %952 = vmatprep.subr.mxu0 0.0
    %953 = vmatpush1.msra.mxu0 %v505
    %954 = vmatprep.subr.mxu0 0.0
    %955 = vmatpush1.msra.mxu0 %v506
    %956 = vmatprep.subr.mxu0 0.0
    %957 = vmatpush1.msra.mxu0 %v507
    %958 = vmatprep.subr.mxu0 0.0
    %959 = vmatpush1.msra.mxu0 %v508
    %960 = vmatprep.subr.mxu0 0.0
    %961 = vmatpush1.msra.mxu0 %v509
    %962 = vmatprep.subr.mxu0 0.0
    %963 = vmatpush1.msra.mxu0 %v510
    %964 = vmatprep.subr.mxu0 0.0
    %965 = vmatpush1.msra.mxu0 %v511
    %966 = vmatprep.subr.mxu0 0.0
    %967 = vmatpush1.msra.mxu0 %v512
    %968 = vmatprep.subr.mxu0 0.0
    %969 = vmatpush1.msra.mxu0 %v513
    %970 = vmatprep.subr.mxu0 0.0
    %971 = vmatpush1.msra.mxu0 %v514
    %972 = vmatprep.subr.mxu0 0.0
    %973 = vmatpush1.msra.mxu0 %v515
    %974 = vmatprep.subr.mxu0 0.0
    %975 = vmatpush1.msra.mxu0 %v516
    %976 = vmatprep.subr.mxu0 0.0
    %977 = vmatpush1.msra.mxu0 %v517
    %978 = vmatprep.subr.mxu0 0.0
    %979 = vmatpush1.msra.mxu0 %v518
    %980 = vmatprep.subr.mxu0 0.0
    %981 = vmatpush1.msra.mxu0 %v519
    %982 = vmatprep.subr.mxu0 0.0
    %983 = vmatpush1.msra.mxu0 %v520
    %984 = vmatprep.subr.mxu0 0.0
    %985 = vmatpush1.msra.mxu0 %v521
    %986 = vmatprep.subr.mxu0 0.0
    %987 = vmatpush1.msra.mxu0 %v522
    %988 = vmatprep.subr.mxu0 0.0
    %989 = vmatpush1.msra.mxu0 %v523
    %990 = vmatprep.mubr.f32.mxu0 %v31
    %991 = vmatmul.mubr.f32.gmra.mrb[0].mxu0 %v30
    %v992 = vpop.f32.mrb[0].mxu0
    %v993 = vadd.f32 %v918, %v992
    %v994 = vpop.f32.mrb[0].mxu0
    %995 = vmatprep.mubr.f32.mxu0 %v55
    %996 = vmatmul.mubr.f32.gmra.mrb[0].mxu0 %v54
    %v997 = vpop.f32.mrb[0].mxu0
    %v998 = vadd.f32 %v923, %v997
    %v999 = vpop.f32.mrb[0].mxu0
    %1000 = vdwg.mxu0
    %1001 = vmatprep.subr.mxu0 0.0
    %1002 = vmatpush1.msra.mxu0 %v524
    %1003 = vmatprep.subr.mxu0 0.0
    %1004 = vmatpush1.msra.mxu0 %v525
    %1005 = vmatprep.subr.mxu0 0.0
    %1006 = vmatpush1.msra.mxu0 %v526
    %1007 = vmatprep.subr.mxu0 0.0
    %1008 = vmatpush1.msra.mxu0 %v527
    %1009 = vmatprep.subr.mxu0 0.0
    %1010 = vmatpush1.msra.mxu0 %v528
    %1011 = vmatprep.subr.mxu0 0.0
    %1012 = vmatpush1.msra.mxu0 %v529
    %1013 = vmatprep.subr.mxu0 0.0
    %1014 = vmatpush1.msra.mxu0 %v530
    %1015 = vmatprep.subr.mxu0 0.0
    %1016 = vmatpush1.msra.mxu0 %v531
    %1017 = vmatprep.subr.mxu0 0.0
    %1018 = vmatpush1.msra.mxu0 %v532
    %1019 = vmatprep.subr.mxu0 0.0
    %1020 = vmatpush1.msra.mxu0 %v533
    %1021 = vmatprep.subr.mxu0 0.0
    %1022 = vmatpush1.msra.mxu0 %v534
    %1023 = vmatprep.subr.mxu0 0.0
    %1024 = vmatpush1.msra.mxu0 %v535
    %1025 = vmatprep.subr.mxu0 0.0
    %1026 = vmatpush1.msra.mxu0 %v536
    %1027 = vmatprep.subr.mxu0 0.0
    %1028 = vmatpush1.msra.mxu0 %v537
    %1029 = vmatprep.subr.mxu0 0.0
    %1030 = vmatpush1.msra.mxu0 %v538
    %1031 = vmatprep.subr.mxu0 0.0
    %1032 = vmatpush1.msra.mxu0 %v539
    %1033 = vmatprep.subr.mxu0 0.0
    %1034 = vmatpush1.msra.mxu0 %v540
    %1035 = vmatprep.subr.mxu0 0.0
    %1036 = vmatpush1.msra.mxu0 %v541
    %1037 = vmatprep.subr.mxu0 0.0
    %1038 = vmatpush1.msra.mxu0 %v542
    %1039 = vmatprep.subr.mxu0 0.0
    %1040 = vmatpush1.msra.mxu0 %v543
    %1041 = vmatprep.subr.mxu0 0.0
    %1042 = vmatpush1.msra.mxu0 %v544
    %1043 = vmatprep.subr.mxu0 0.0
    %1044 = vmatpush1.msra.mxu0 %v545
    %1045 = vmatprep.subr.mxu0 0.0
    %1046 = vmatpush1.msra.mxu0 %v546
    %1047 = vmatprep.subr.mxu0 0.0
    %1048 = vmatpush1.msra.mxu0 %v547
    %1049 = vmatprep.subr.mxu0 0.0
    %1050 = vmatpush1.msra.mxu0 %v548
    %1051 = vmatprep.subr.mxu0 0.0
    %1052 = vmatpush1.msra.mxu0 %v549
    %1053 = vmatprep.subr.mxu0 0.0
    %1054 = vmatpush1.msra.mxu0 %v550
    %1055 = vmatprep.subr.mxu0 0.0
    %1056 = vmatpush1.msra.mxu0 %v551
    %1057 = vmatprep.subr.mxu0 0.0
    %1058 = vmatpush1.msra.mxu0 %v552
    %1059 = vmatprep.subr.mxu0 0.0
    %1060 = vmatpush1.msra.mxu0 %v553
    %1061 = vmatprep.subr.mxu0 0.0
    %1062 = vmatpush1.msra.mxu0 %v554
    %1063 = vmatprep.subr.mxu0 0.0
    %1064 = vmatpush1.msra.mxu0 %v555
    %1065 = vmatprep.mubr.f32.mxu0 %v33
    %1066 = vmatmul.mubr.f32.gmra.mrb[0].mxu0 %v32
    %v1067 = vpop.f32.mrb[0].mxu0
    %v1068 = vadd.f32 %v993, %v1067
    %v1069 = vpop.f32.mrb[0].mxu0
    %1070 = vmatprep.mubr.f32.mxu0 %v57
    %1071 = vmatmul.mubr.f32.gmra.mrb[0].mxu0 %v56
    %v1072 = vpop.f32.mrb[0].mxu0
    %v1073 = vadd.f32 %v998, %v1072
    %v1074 = vpop.f32.mrb[0].mxu0
    %1075 = vdwg.mxu0
    %1076 = vmatprep.subr.mxu0 0.0
    %1077 = vmatpush1.msra.mxu0 %v556
    %1078 = vmatprep.subr.mxu0 0.0
    %1079 = vmatpush1.msra.mxu0 %v557
    %1080 = vmatprep.subr.mxu0 0.0
    %1081 = vmatpush1.msra.mxu0 %v558
    %1082 = vmatprep.subr.mxu0 0.0
    %1083 = vmatpush1.msra.mxu0 %v559
    %1084 = vmatprep.subr.mxu0 0.0
    %1085 = vmatpush1.msra.mxu0 %v560
    %1086 = vmatprep.subr.mxu0 0.0
    %1087 = vmatpush1.msra.mxu0 %v561
    %1088 = vmatprep.subr.mxu0 0.0
    %1089 = vmatpush1.msra.mxu0 %v562
    %1090 = vmatprep.subr.mxu0 0.0
    %1091 = vmatpush1.msra.mxu0 %v563
    %1092 = vmatprep.subr.mxu0 0.0
    %1093 = vmatpush1.msra.mxu0 %v564
    %1094 = vmatprep.subr.mxu0 0.0
    %1095 = vmatpush1.msra.mxu0 %v565
    %1096 = vmatprep.subr.mxu0 0.0
    %1097 = vmatpush1.msra.mxu0 %v566
    %1098 = vmatprep.subr.mxu0 0.0
    %1099 = vmatpush1.msra.mxu0 %v567
    %1100 = vmatprep.subr.mxu0 0.0
    %1101 = vmatpush1.msra.mxu0 %v568
    %1102 = vmatprep.subr.mxu0 0.0
    %1103 = vmatpush1.msra.mxu0 %v569
    %1104 = vmatprep.subr.mxu0 0.0
    %1105 = vmatpush1.msra.mxu0 %v570
    %1106 = vmatprep.subr.mxu0 0.0
    %1107 = vmatpush1.msra.mxu0 %v571
    %1108 = vmatprep.subr.mxu0 0.0
    %1109 = vmatpush1.msra.mxu0 %v572
    %1110 = vmatprep.subr.mxu0 0.0
    %1111 = vmatpush1.msra.mxu0 %v573
    %1112 = vmatprep.subr.mxu0 0.0
    %1113 = vmatpush1.msra.mxu0 %v574
    %1114 = vmatprep.subr.mxu0 0.0
    %1115 = vmatpush1.msra.mxu0 %v575
    %1116 = vmatprep.subr.mxu0 0.0
    %1117 = vmatpush1.msra.mxu0 %v576
    %1118 = vmatprep.subr.mxu0 0.0
    %1119 = vmatpush1.msra.mxu0 %v577
    %1120 = vmatprep.subr.mxu0 0.0
    %1121 = vmatpush1.msra.mxu0 %v578
    %1122 = vmatprep.subr.mxu0 0.0
    %1123 = vmatpush1.msra.mxu0 %v579
    %1124 = vmatprep.subr.mxu0 0.0
    %1125 = vmatpush1.msra.mxu0 %v580
    %1126 = vmatprep.subr.mxu0 0.0
    %1127 = vmatpush1.msra.mxu0 %v581
    %1128 = vmatprep.subr.mxu0 0.0
    %1129 = vmatpush1.msra.mxu0 %v582
    %1130 = vmatprep.subr.mxu0 0.0
    %1131 = vmatpush1.msra.mxu0 %v583
    %1132 = vmatprep.subr.mxu0 0.0
    %1133 = vmatpush1.msra.mxu0 %v584
    %1134 = vmatprep.subr.mxu0 0.0
    %1135 = vmatpush1.msra.mxu0 %v585
    %1136 = vmatprep.subr.mxu0 0.0
    %1137 = vmatpush1.msra.mxu0 %v586
    %1138 = vmatprep.subr.mxu0 0.0
    %1139 = vmatpush1.msra.mxu0 %v587
    %1140 = vmatprep.mubr.f32.mxu0 %v35
    %1141 = vmatmul.mubr.f32.gmra.mrb[0].mxu0 %v34
    %v1142 = vpop.f32.mrb[0].mxu0
    %v1143 = vadd.f32 %v1068, %v1142
    %v1144 = vpop.f32.mrb[0].mxu0
    %1145 = vmatprep.mubr.f32.mxu0 %v59
    %1146 = vmatmul.mubr.f32.gmra.mrb[0].mxu0 %v58
    %v1147 = vpop.f32.mrb[0].mxu0
    %v1148 = vadd.f32 %v1073, %v1147
    %v1149 = vpop.f32.mrb[0].mxu0
    %1150 = vdwg.mxu0
    %1151 = vmatprep.subr.mxu0 0.0
    %1152 = vmatpush1.msra.mxu0 %v588
    %1153 = vmatprep.subr.mxu0 0.0
    %1154 = vmatpush1.msra.mxu0 %v589
    %1155 = vmatprep.subr.mxu0 0.0
    %1156 = vmatpush1.msra.mxu0 %v590
    %1157 = vmatprep.subr.mxu0 0.0
    %1158 = vmatpush1.msra.mxu0 %v591
    %1159 = vmatprep.subr.mxu0 0.0
    %1160 = vmatpush1.msra.mxu0 %v592
    %1161 = vmatprep.subr.mxu0 0.0
    %1162 = vmatpush1.msra.mxu0 %v593
    %1163 = vmatprep.subr.mxu0 0.0
    %1164 = vmatpush1.msra.mxu0 %v594
    %1165 = vmatprep.subr.mxu0 0.0
    %1166 = vmatpush1.msra.mxu0 %v595
    %1167 = vmatprep.subr.mxu0 0.0
    %1168 = vmatpush1.msra.mxu0 %v596
    %1169 = vmatprep.subr.mxu0 0.0
    %1170 = vmatpush1.msra.mxu0 %v597
    %1171 = vmatprep.subr.mxu0 0.0
    %1172 = vmatpush1.msra.mxu0 %v598
    %1173 = vmatprep.subr.mxu0 0.0
    %1174 = vmatpush1.msra.mxu0 %v599
    %1175 = vmatprep.subr.mxu0 0.0
    %1176 = vmatpush1.msra.mxu0 %v600
    %1177 = vmatprep.subr.mxu0 0.0
    %1178 = vmatpush1.msra.mxu0 %v601
    %1179 = vmatprep.subr.mxu0 0.0
    %1180 = vmatpush1.msra.mxu0 %v602
    %1181 = vmatprep.subr.mxu0 0.0
    %1182 = vmatpush1.msra.mxu0 %v603
    %1183 = vmatprep.subr.mxu0 0.0
    %1184 = vmatpush1.msra.mxu0 %v604
    %1185 = vmatprep.subr.mxu0 0.0
    %1186 = vmatpush1.msra.mxu0 %v605
    %1187 = vmatprep.subr.mxu0 0.0
    %1188 = vmatpush1.msra.mxu0 %v606
    %1189 = vmatprep.subr.mxu0 0.0
    %1190 = vmatpush1.msra.mxu0 %v607
    %1191 = vmatprep.subr.mxu0 0.0
    %1192 = vmatpush1.msra.mxu0 %v608
    %1193 = vmatprep.subr.mxu0 0.0
    %1194 = vmatpush1.msra.mxu0 %v609
    %1195 = vmatprep.subr.mxu0 0.0
    %1196 = vmatpush1.msra.mxu0 %v610
    %1197 = vmatprep.subr.mxu0 0.0
    %1198 = vmatpush1.msra.mxu0 %v611
    %1199 = vmatprep.subr.mxu0 0.0
    %1200 = vmatpush1.msra.mxu0 %v612
    %1201 = vmatprep.subr.mxu0 0.0
    %1202 = vmatpush1.msra.mxu0 %v613
    %1203 = vmatprep.subr.mxu0 0.0
    %1204 = vmatpush1.msra.mxu0 %v614
    %1205 = vmatprep.subr.mxu0 0.0
    %1206 = vmatpush1.msra.mxu0 %v615
    %1207 = vmatprep.subr.mxu0 0.0
    %1208 = vmatpush1.msra.mxu0 %v616
    %1209 = vmatprep.subr.mxu0 0.0
    %1210 = vmatpush1.msra.mxu0 %v617
    %1211 = vmatprep.subr.mxu0 0.0
    %1212 = vmatpush1.msra.mxu0 %v618
    %1213 = vmatprep.subr.mxu0 0.0
    %1214 = vmatpush1.msra.mxu0 %v619
    %1215 = vmatprep.mubr.f32.mxu0 %v37
    %1216 = vmatmul.mubr.f32.gmra.mrb[0].mxu0 %v36
    %v1217 = vpop.f32.mrb[0].mxu0
    %v1218 = vadd.f32 %v1143, %v1217
    %v1219 = vpop.f32.mrb[0].mxu0
    %1220 = vmatprep.mubr.f32.mxu0 %v61
    %1221 = vmatmul.mubr.f32.gmra.mrb[0].mxu0 %v60
    %v1222 = vpop.f32.mrb[0].mxu0
    %v1223 = vadd.f32 %v1148, %v1222
    %v1224 = vpop.f32.mrb[0].mxu0
    %1225 = vdwg.mxu0
    %1226 = vmatprep.subr.mxu0 0.0
    %1227 = vmatpush1.msra.mxu0 %v620
    %1228 = vmatprep.subr.mxu0 0.0
    %1229 = vmatpush1.msra.mxu0 %v621
    %1230 = vmatprep.subr.mxu0 0.0
    %1231 = vmatpush1.msra.mxu0 %v622
    %1232 = vmatprep.subr.mxu0 0.0
    %1233 = vmatpush1.msra.mxu0 %v623
    %1234 = vmatprep.subr.mxu0 0.0
    %1235 = vmatpush1.msra.mxu0 %v624
    %1236 = vmatprep.subr.mxu0 0.0
    %1237 = vmatpush1.msra.mxu0 %v625
    %1238 = vmatprep.subr.mxu0 0.0
    %1239 = vmatpush1.msra.mxu0 %v626
    %1240 = vmatprep.subr.mxu0 0.0
    %1241 = vmatpush1.msra.mxu0 %v627
    %1242 = vmatprep.subr.mxu0 0.0
    %1243 = vmatpush1.msra.mxu0 %v628
    %1244 = vmatprep.subr.mxu0 0.0
    %1245 = vmatpush1.msra.mxu0 %v629
    %1246 = vmatprep.subr.mxu0 0.0
    %1247 = vmatpush1.msra.mxu0 %v630
    %1248 = vmatprep.subr.mxu0 0.0
    %1249 = vmatpush1.msra.mxu0 %v631
    %1250 = vmatprep.subr.mxu0 0.0
    %1251 = vmatpush1.msra.mxu0 %v632
    %1252 = vmatprep.subr.mxu0 0.0
    %1253 = vmatpush1.msra.mxu0 %v633
    %1254 = vmatprep.subr.mxu0 0.0
    %1255 = vmatpush1.msra.mxu0 %v634
    %1256 = vmatprep.subr.mxu0 0.0
    %1257 = vmatpush1.msra.mxu0 %v635
    %1258 = vmatprep.subr.mxu0 0.0
    %1259 = vmatpush1.msra.mxu0 %v636
    %1260 = vmatprep.subr.mxu0 0.0
    %1261 = vmatpush1.msra.mxu0 %v637
    %1262 = vmatprep.subr.mxu0 0.0
    %1263 = vmatpush1.msra.mxu0 %v638
    %1264 = vmatprep.subr.mxu0 0.0
    %1265 = vmatpush1.msra.mxu0 %v639
    %1266 = vmatprep.subr.mxu0 0.0
    %1267 = vmatpush1.msra.mxu0 %v640
    %1268 = vmatprep.subr.mxu0 0.0
    %1269 = vmatpush1.msra.mxu0 %v641
    %1270 = vmatprep.subr.mxu0 0.0
    %1271 = vmatpush1.msra.mxu0 %v642
    %1272 = vmatprep.subr.mxu0 0.0
    %1273 = vmatpush1.msra.mxu0 %v643
    %1274 = vmatprep.subr.mxu0 0.0
    %1275 = vmatpush1.msra.mxu0 %v644
    %1276 = vmatprep.subr.mxu0 0.0
    %1277 = vmatpush1.msra.mxu0 %v645
    %1278 = vmatprep.subr.mxu0 0.0
    %1279 = vmatpush1.msra.mxu0 %v646
    %1280 = vmatprep.subr.mxu0 0.0
    %1281 = vmatpush1.msra.mxu0 %v647
    %1282 = vmatprep.subr.mxu0 0.0
    %1283 = vmatpush1.msra.mxu0 %v648
    %1284 = vmatprep.subr.mxu0 0.0
    %1285 = vmatpush1.msra.mxu0 %v649
    %1286 = vmatprep.subr.mxu0 0.0
    %1287 = vmatpush1.msra.mxu0 %v650
    %1288 = vmatprep.subr.mxu0 0.0
    %1289 = vmatpush1.msra.mxu0 %v651
    %1290 = vmatprep.mubr.f32.mxu0 %v39
    %1291 = vmatmul.mubr.f32.gmra.mrb[0].mxu0 %v38
    %v1292 = vpop.f32.mrb[0].mxu0
    %v1293 = vadd.f32 %v1218, %v1292
    %v1294 = vpop.f32.mrb[0].mxu0
    %1295 = vmatprep.mubr.f32.mxu0 %v63
    %1296 = vmatmul.mubr.f32.gmra.mrb[0].mxu0 %v62
    %v1297 = vpop.f32.mrb[0].mxu0
    %v1298 = vadd.f32 %v1223, %v1297
    %v1299 = vpop.f32.mrb[0].mxu0
    %1300 = vdwg.mxu0
    %1301 = vmatprep.subr.mxu0 0.0
    %1302 = vmatpush1.msra.mxu0 %v652
    %1303 = vmatprep.subr.mxu0 0.0
    %1304 = vmatpush1.msra.mxu0 %v653
    %1305 = vmatprep.subr.mxu0 0.0
    %1306 = vmatpush1.msra.mxu0 %v654
    %1307 = vmatprep.subr.mxu0 0.0
    %1308 = vmatpush1.msra.mxu0 %v655
    %1309 = vmatprep.subr.mxu0 0.0
    %1310 = vmatpush1.msra.mxu0 %v656
    %1311 = vmatprep.subr.mxu0 0.0
    %1312 = vmatpush1.msra.mxu0 %v657
    %1313 = vmatprep.subr.mxu0 0.0
    %1314 = vmatpush1.msra.mxu0 %v658
    %1315 = vmatprep.subr.mxu0 0.0
    %1316 = vmatpush1.msra.mxu0 %v659
    %1317 = vmatprep.subr.mxu0 0.0
    %1318 = vmatpush1.msra.mxu0 %v660
    %1319 = vmatprep.subr.mxu0 0.0
    %1320 = vmatpush1.msra.mxu0 %v661
    %1321 = vmatprep.subr.mxu0 0.0
    %1322 = vmatpush1.msra.mxu0 %v662
    %1323 = vmatprep.subr.mxu0 0.0
    %1324 = vmatpush1.msra.mxu0 %v663
    %1325 = vmatprep.subr.mxu0 0.0
    %1326 = vmatpush1.msra.mxu0 %v664
    %1327 = vmatprep.subr.mxu0 0.0
    %1328 = vmatpush1.msra.mxu0 %v665
    %1329 = vmatprep.subr.mxu0 0.0
    %1330 = vmatpush1.msra.mxu0 %v666
    %1331 = vmatprep.subr.mxu0 0.0
    %1332 = vmatpush1.msra.mxu0 %v667
    %1333 = vmatprep.subr.mxu0 0.0
    %1334 = vmatpush1.msra.mxu0 %v668
    %1335 = vmatprep.subr.mxu0 0.0
    %1336 = vmatpush1.msra.mxu0 %v669
    %1337 = vmatprep.subr.mxu0 0.0
    %1338 = vmatpush1.msra.mxu0 %v670
    %1339 = vmatprep.subr.mxu0 0.0
    %1340 = vmatpush1.msra.mxu0 %v671
    %1341 = vmatprep.subr.mxu0 0.0
    %1342 = vmatpush1.msra.mxu0 %v672
    %1343 = vmatprep.subr.mxu0 0.0
    %1344 = vmatpush1.msra.mxu0 %v673
    %1345 = vmatprep.subr.mxu0 0.0
    %1346 = vmatpush1.msra.mxu0 %v674
    %1347 = vmatprep.subr.mxu0 0.0
    %1348 = vmatpush1.msra.mxu0 %v675
    %1349 = vmatprep.subr.mxu0 0.0
    %1350 = vmatpush1.msra.mxu0 %v676
    %1351 = vmatprep.subr.mxu0 0.0
    %1352 = vmatpush1.msra.mxu0 %v677
    %1353 = vmatprep.subr.mxu0 0.0
    %1354 = vmatpush1.msra.mxu0 %v678
    %1355 = vmatprep.subr.mxu0 0.0
    %1356 = vmatpush1.msra.mxu0 %v679
    %1357 = vmatprep.subr.mxu0 0.0
    %1358 = vmatpush1.msra.mxu0 %v680
    %1359 = vmatprep.subr.mxu0 0.0
    %1360 = vmatpush1.msra.mxu0 %v681
    %1361 = vmatprep.subr.mxu0 0.0
    %1362 = vmatpush1.msra.mxu0 %v682
    %1363 = vmatprep.subr.mxu0 0.0
    %1364 = vmatpush1.msra.mxu0 %v683
    %1365 = vmatprep.mubr.f32.mxu0 %v41
    %1366 = vmatmul.mubr.f32.gmra.mrb[0].mxu0 %v40
    %v1367 = vpop.f32.mrb[0].mxu0
    %v1368 = vadd.f32 %v1293, %v1367
    %v1369 = vpop.f32.mrb[0].mxu0
    %1370 = vmatprep.mubr.f32.mxu0 %v65
    %1371 = vmatmul.mubr.f32.gmra.mrb[0].mxu0 %v64
    %v1372 = vpop.f32.mrb[0].mxu0
    %v1373 = vadd.f32 %v1298, %v1372
    %v1374 = vpop.f32.mrb[0].mxu0
    %1375 = vdwg.mxu0
    %1376 = vmatprep.subr.mxu0 0.0
    %1377 = vmatpush1.msra.mxu0 %v684
    %1378 = vmatprep.subr.mxu0 0.0
    %1379 = vmatpush1.msra.mxu0 %v685
    %1380 = vmatprep.subr.mxu0 0.0
    %1381 = vmatpush1.msra.mxu0 %v686
    %1382 = vmatprep.subr.mxu0 0.0
    %1383 = vmatpush1.msra.mxu0 %v687
    %1384 = vmatprep.subr.mxu0 0.0
    %1385 = vmatpush1.msra.mxu0 %v688
    %1386 = vmatprep.subr.mxu0 0.0
    %1387 = vmatpush1.msra.mxu0 %v689
    %1388 = vmatprep.subr.mxu0 0.0
    %1389 = vmatpush1.msra.mxu0 %v690
    %1390 = vmatprep.subr.mxu0 0.0
    %1391 = vmatpush1.msra.mxu0 %v691
    %1392 = vmatprep.subr.mxu0 0.0
    %1393 = vmatpush1.msra.mxu0 %v692
    %1394 = vmatprep.subr.mxu0 0.0
    %1395 = vmatpush1.msra.mxu0 %v693
    %1396 = vmatprep.subr.mxu0 0.0
    %1397 = vmatpush1.msra.mxu0 %v694
    %1398 = vmatprep.subr.mxu0 0.0
    %1399 = vmatpush1.msra.mxu0 %v695
    %1400 = vmatprep.subr.mxu0 0.0
    %1401 = vmatpush1.msra.mxu0 %v696
    %1402 = vmatprep.subr.mxu0 0.0
    %1403 = vmatpush1.msra.mxu0 %v697
    %1404 = vmatprep.subr.mxu0 0.0
    %1405 = vmatpush1.msra.mxu0 %v698
    %1406 = vmatprep.subr.mxu0 0.0
    %1407 = vmatpush1.msra.mxu0 %v699
    %1408 = vmatprep.subr.mxu0 0.0
    %1409 = vmatpush1.msra.mxu0 %v700
    %1410 = vmatprep.subr.mxu0 0.0
    %1411 = vmatpush1.msra.mxu0 %v701
    %1412 = vmatprep.subr.mxu0 0.0
    %1413 = vmatpush1.msra.mxu0 %v702
    %1414 = vmatprep.subr.mxu0 0.0
    %1415 = vmatpush1.msra.mxu0 %v703
    %1416 = vmatprep.subr.mxu0 0.0
    %1417 = vmatpush1.msra.mxu0 %v704
    %1418 = vmatprep.subr.mxu0 0.0
    %1419 = vmatpush1.msra.mxu0 %v705
    %1420 = vmatprep.subr.mxu0 0.0
    %1421 = vmatpush1.msra.mxu0 %v706
    %1422 = vmatprep.subr.mxu0 0.0
    %1423 = vmatpush1.msra.mxu0 %v707
    %1424 = vmatprep.subr.mxu0 0.0
    %1425 = vmatpush1.msra.mxu0 %v708
    %1426 = vmatprep.subr.mxu0 0.0
    %1427 = vmatpush1.msra.mxu0 %v709
    %1428 = vmatprep.subr.mxu0 0.0
    %1429 = vmatpush1.msra.mxu0 %v710
    %1430 = vmatprep.subr.mxu0 0.0
    %1431 = vmatpush1.msra.mxu0 %v711
    %1432 = vmatprep.subr.mxu0 0.0
    %1433 = vmatpush1.msra.mxu0 %v712
    %1434 = vmatprep.subr.mxu0 0.0
    %1435 = vmatpush1.msra.mxu0 %v713
    %1436 = vmatprep.subr.mxu0 0.0
    %1437 = vmatpush1.msra.mxu0 %v714
    %1438 = vmatprep.subr.mxu0 0.0
    %1439 = vmatpush1.msra.mxu0 %v715
    %1440 = vmatprep.mubr.f32.mxu0 %v43
    %1441 = vmatmul.mubr.f32.gmra.mrb[0].mxu0 %v42
    %v1442 = vpop.f32.mrb[0].mxu0
    %v1443 = vadd.f32 %v1368, %v1442
    %v1444 = vpop.f32.mrb[0].mxu0
    %1445 = vmatprep.mubr.f32.mxu0 %v67
    %1446 = vmatmul.mubr.f32.gmra.mrb[0].mxu0 %v66
    %v1447 = vpop.f32.mrb[0].mxu0
    %v1448 = vadd.f32 %v1373, %v1447
    %v1449 = vpop.f32.mrb[0].mxu0
    %1450 = vdwg.mxu0
    %1451 = vmatprep.subr.mxu0 0.0
    %1452 = vmatpush1.msra.mxu0 %v716
    %1453 = vmatprep.subr.mxu0 0.0
    %1454 = vmatpush1.msra.mxu0 %v717
    %1455 = vmatprep.subr.mxu0 0.0
    %1456 = vmatpush1.msra.mxu0 %v718
    %1457 = vmatprep.subr.mxu0 0.0
    %1458 = vmatpush1.msra.mxu0 %v719
    %1459 = vmatprep.subr.mxu0 0.0
    %1460 = vmatpush1.msra.mxu0 %v720
    %1461 = vmatprep.subr.mxu0 0.0
    %1462 = vmatpush1.msra.mxu0 %v721
    %1463 = vmatprep.subr.mxu0 0.0
    %1464 = vmatpush1.msra.mxu0 %v722
    %1465 = vmatprep.subr.mxu0 0.0
    %1466 = vmatpush1.msra.mxu0 %v723
    %1467 = vmatprep.subr.mxu0 0.0
    %1468 = vmatpush1.msra.mxu0 %v724
    %1469 = vmatprep.subr.mxu0 0.0
    %1470 = vmatpush1.msra.mxu0 %v725
    %1471 = vmatprep.subr.mxu0 0.0
    %1472 = vmatpush1.msra.mxu0 %v726
    %1473 = vmatprep.subr.mxu0 0.0
    %1474 = vmatpush1.msra.mxu0 %v727
    %1475 = vmatprep.subr.mxu0 0.0
    %1476 = vmatpush1.msra.mxu0 %v728
    %1477 = vmatprep.subr.mxu0 0.0
    %1478 = vmatpush1.msra.mxu0 %v729
    %1479 = vmatprep.subr.mxu0 0.0
    %1480 = vmatpush1.msra.mxu0 %v730
    %1481 = vmatprep.subr.mxu0 0.0
    %1482 = vmatpush1.msra.mxu0 %v731
    %1483 = vmatprep.subr.mxu0 0.0
    %1484 = vmatpush1.msra.mxu0 %v732
    %1485 = vmatprep.subr.mxu0 0.0
    %1486 = vmatpush1.msra.mxu0 %v733
    %1487 = vmatprep.subr.mxu0 0.0
    %1488 = vmatpush1.msra.mxu0 %v734
    %1489 = vmatprep.subr.mxu0 0.0
    %1490 = vmatpush1.msra.mxu0 %v735
    %1491 = vmatprep.subr.mxu0 0.0
    %1492 = vmatpush1.msra.mxu0 %v736
    %1493 = vmatprep.subr.mxu0 0.0
    %1494 = vmatpush1.msra.mxu0 %v737
    %1495 = vmatprep.subr.mxu0 0.0
    %1496 = vmatpush1.msra.mxu0 %v738
    %1497 = vmatprep.subr.mxu0 0.0
    %1498 = vmatpush1.msra.mxu0 %v739
    %1499 = vmatprep.subr.mxu0 0.0
    %1500 = vmatpush1.msra.mxu0 %v740
    %1501 = vmatprep.subr.mxu0 0.0
    %1502 = vmatpush1.msra.mxu0 %v741
    %1503 = vmatprep.subr.mxu0 0.0
    %1504 = vmatpush1.msra.mxu0 %v742
    %1505 = vmatprep.subr.mxu0 0.0
    %1506 = vmatpush1.msra.mxu0 %v743
    %1507 = vmatprep.subr.mxu0 0.0
    %1508 = vmatpush1.msra.mxu0 %v744
    %1509 = vmatprep.subr.mxu0 0.0
    %1510 = vmatpush1.msra.mxu0 %v745
    %1511 = vmatprep.subr.mxu0 0.0
    %1512 = vmatpush1.msra.mxu0 %v746
    %1513 = vmatprep.subr.mxu0 0.0
    %1514 = vmatpush1.msra.mxu0 %v747
    %1515 = vmatprep.mubr.f32.mxu0 %v45
    %1516 = vmatmul.mubr.f32.gmra.mrb[0].mxu0 %v44
    %v1517 = vpop.f32.mrb[0].mxu0
    %v1518 = vadd.f32 %v1443, %v1517
    %v1519 = vpop.f32.mrb[0].mxu0
    %1520 = vmatprep.mubr.f32.mxu0 %v69
    %1521 = vmatmul.mubr.f32.gmra.mrb[0].mxu0 %v68
    %v1522 = vpop.f32.mrb[0].mxu0
    %v1523 = vadd.f32 %v1448, %v1522
    %v1524 = vpop.f32.mrb[0].mxu0
    %1525 = vdwg.mxu0
    %1526 = vmatprep.subr.mxu0 0.0
    %1527 = vmatpush1.msra.mxu0 %v748
    %1528 = vmatprep.subr.mxu0 0.0
    %1529 = vmatpush1.msra.mxu0 %v749
    %1530 = vmatprep.subr.mxu0 0.0
    %1531 = vmatpush1.msra.mxu0 %v750
    %1532 = vmatprep.subr.mxu0 0.0
    %1533 = vmatpush1.msra.mxu0 %v751
    %1534 = vmatprep.subr.mxu0 0.0
    %1535 = vmatpush1.msra.mxu0 %v752
    %1536 = vmatprep.subr.mxu0 0.0
    %1537 = vmatpush1.msra.mxu0 %v753
    %1538 = vmatprep.subr.mxu0 0.0
    %1539 = vmatpush1.msra.mxu0 %v754
    %1540 = vmatprep.subr.mxu0 0.0
    %1541 = vmatpush1.msra.mxu0 %v755
    %1542 = vmatprep.subr.mxu0 0.0
    %1543 = vmatpush1.msra.mxu0 %v756
    %1544 = vmatprep.subr.mxu0 0.0
    %1545 = vmatpush1.msra.mxu0 %v757
    %1546 = vmatprep.subr.mxu0 0.0
    %1547 = vmatpush1.msra.mxu0 %v758
    %1548 = vmatprep.subr.mxu0 0.0
    %1549 = vmatpush1.msra.mxu0 %v759
    %1550 = vmatprep.subr.mxu0 0.0
    %1551 = vmatpush1.msra.mxu0 %v760
    %1552 = vmatprep.subr.mxu0 0.0
    %1553 = vmatpush1.msra.mxu0 %v761
    %1554 = vmatprep.subr.mxu0 0.0
    %1555 = vmatpush1.msra.mxu0 %v762
    %1556 = vmatprep.subr.mxu0 0.0
    %1557 = vmatpush1.msra.mxu0 %v763
    %1558 = vmatprep.subr.mxu0 0.0
    %1559 = vmatpush1.msra.mxu0 %v764
    %1560 = vmatprep.subr.mxu0 0.0
    %1561 = vmatpush1.msra.mxu0 %v765
    %1562 = vmatprep.subr.mxu0 0.0
    %1563 = vmatpush1.msra.mxu0 %v766
    %1564 = vmatprep.subr.mxu0 0.0
    %1565 = vmatpush1.msra.mxu0 %v767
    %1566 = vmatprep.subr.mxu0 0.0
    %1567 = vmatpush1.msra.mxu0 %v768
    %1568 = vmatprep.subr.mxu0 0.0
    %1569 = vmatpush1.msra.mxu0 %v769
    %1570 = vmatprep.subr.mxu0 0.0
    %1571 = vmatpush1.msra.mxu0 %v770
    %1572 = vmatprep.subr.mxu0 0.0
    %1573 = vmatpush1.msra.mxu0 %v771
    %1574 = vmatprep.subr.mxu0 0.0
    %1575 = vmatpush1.msra.mxu0 %v772
    %1576 = vmatprep.subr.mxu0 0.0
    %1577 = vmatpush1.msra.mxu0 %v773
    %1578 = vmatprep.subr.mxu0 0.0
    %1579 = vmatpush1.msra.mxu0 %v774
    %1580 = vmatprep.subr.mxu0 0.0
    %1581 = vmatpush1.msra.mxu0 %v775
    %1582 = vmatprep.subr.mxu0 0.0
    %1583 = vmatpush1.msra.mxu0 %v776
    %1584 = vmatprep.subr.mxu0 0.0
    %1585 = vmatpush1.msra.mxu0 %v777
    %1586 = vmatprep.subr.mxu0 0.0
    %1587 = vmatpush1.msra.mxu0 %v778
    %1588 = vmatprep.subr.mxu0 0.0
    %1589 = vmatpush1.msra.mxu0 %v779
    %1590 = vmatprep.mubr.f32.mxu0 %v47
    %1591 = vmatmul.mubr.f32.gmra.mrb[0].mxu0 %v46
    %v1592 = vpop.f32.mrb[0].mxu0
    %v1593 = vadd.f32 %v1518, %v1592
    %v1594 = vpop.f32.mrb[0].mxu0
    %1595 = vmatprep.mubr.f32.mxu0 %v71
    %1596 = vmatmul.mubr.f32.gmra.mrb[0].mxu0 %v70
    %v1597 = vpop.f32.mrb[0].mxu0
    %v1598 = vadd.f32 %v1523, %v1597
    %v1599 = vpop.f32.mrb[0].mxu0
    %1600 = vdwg.mxu0
    %1601 = vmatprep.subr.mxu0 0.0
    %1602 = vmatpush1.msra.mxu0 %v780
    %1603 = vmatprep.subr.mxu0 0.0
    %1604 = vmatpush1.msra.mxu0 %v781
    %1605 = vmatprep.subr.mxu0 0.0
    %1606 = vmatpush1.msra.mxu0 %v782
    %1607 = vmatprep.subr.mxu0 0.0
    %1608 = vmatpush1.msra.mxu0 %v783
    %1609 = vmatprep.subr.mxu0 0.0
    %1610 = vmatpush1.msra.mxu0 %v784
    %1611 = vmatprep.subr.mxu0 0.0
    %1612 = vmatpush1.msra.mxu0 %v785
    %1613 = vmatprep.subr.mxu0 0.0
    %1614 = vmatpush1.msra.mxu0 %v786
    %1615 = vmatprep.subr.mxu0 0.0
    %1616 = vmatpush1.msra.mxu0 %v787
    %1617 = vmatprep.subr.mxu0 0.0
    %1618 = vmatpush1.msra.mxu0 %v788
    %1619 = vmatprep.subr.mxu0 0.0
    %1620 = vmatpush1.msra.mxu0 %v789
    %1621 = vmatprep.subr.mxu0 0.0
    %1622 = vmatpush1.msra.mxu0 %v790
    %1623 = vmatprep.subr.mxu0 0.0
    %1624 = vmatpush1.msra.mxu0 %v791
    %1625 = vmatprep.subr.mxu0 0.0
    %1626 = vmatpush1.msra.mxu0 %v792
    %1627 = vmatprep.subr.mxu0 0.0
    %1628 = vmatpush1.msra.mxu0 %v793
    %1629 = vmatprep.subr.mxu0 0.0
    %1630 = vmatpush1.msra.mxu0 %v794
    %1631 = vmatprep.subr.mxu0 0.0
    %1632 = vmatpush1.msra.mxu0 %v795
    %1633 = vmatprep.subr.mxu0 0.0
    %1634 = vmatpush1.msra.mxu0 %v796
    %1635 = vmatprep.subr.mxu0 0.0
    %1636 = vmatpush1.msra.mxu0 %v797
    %1637 = vmatprep.subr.mxu0 0.0
    %1638 = vmatpush1.msra.mxu0 %v798
    %1639 = vmatprep.subr.mxu0 0.0
    %1640 = vmatpush1.msra.mxu0 %v799
    %1641 = vmatprep.subr.mxu0 0.0
    %1642 = vmatpush1.msra.mxu0 %v800
    %1643 = vmatprep.subr.mxu0 0.0
    %1644 = vmatpush1.msra.mxu0 %v801
    %1645 = vmatprep.subr.mxu0 0.0
    %1646 = vmatpush1.msra.mxu0 %v802
    %1647 = vmatprep.subr.mxu0 0.0
    %1648 = vmatpush1.msra.mxu0 %v803
    %1649 = vmatprep.subr.mxu0 0.0
    %1650 = vmatpush1.msra.mxu0 %v804
    %1651 = vmatprep.subr.mxu0 0.0
    %1652 = vmatpush1.msra.mxu0 %v805
    %1653 = vmatprep.subr.mxu0 0.0
    %1654 = vmatpush1.msra.mxu0 %v806
    %1655 = vmatprep.subr.mxu0 0.0
    %1656 = vmatpush1.msra.mxu0 %v807
    %1657 = vmatprep.subr.mxu0 0.0
    %1658 = vmatpush1.msra.mxu0 %v808
    %1659 = vmatprep.subr.mxu0 0.0
    %1660 = vmatpush1.msra.mxu0 %v809
    %1661 = vmatprep.subr.mxu0 0.0
    %1662 = vmatpush1.msra.mxu0 %v810
    %1663 = vmatprep.subr.mxu0 0.0
    %1664 = vmatpush1.msra.mxu0 %v811
    %1665 = vmatprep.mubr.f32.mxu0 %v49
    %1666 = vmatmul.mubr.f32.gmra.mrb[0].mxu0 %v48
    %v1667 = vpop.f32.mrb[0].mxu0
    %v1668 = vadd.f32 %v1593, %v1667
    %v1669 = vpop.f32.mrb[0].mxu0
    %1670 = vmatprep.mubr.f32.mxu0 %v73
    %1671 = vmatmul.mubr.f32.gmra.mrb[0].mxu0 %v72
    %v1672 = vpop.f32.mrb[0].mxu0
    %v1673 = vadd.f32 %v1598, %v1672
    %v1674 = vpop.f32.mrb[0].mxu0
    %1675 = vdwg.mxu0
    %1676 = vmatprep.subr.mxu0 0.0
    %1677 = vmatpush1.msra.mxu0 %v812
    %1678 = vmatprep.subr.mxu0 0.0
    %1679 = vmatpush1.msra.mxu0 %v813
    %1680 = vmatprep.subr.mxu0 0.0
    %1681 = vmatpush1.msra.mxu0 %v814
    %1682 = vmatprep.subr.mxu0 0.0
    %1683 = vmatpush1.msra.mxu0 %v815
    %1684 = vmatprep.subr.mxu0 0.0
    %1685 = vmatpush1.msra.mxu0 %v816
    %1686 = vmatprep.subr.mxu0 0.0
    %1687 = vmatpush1.msra.mxu0 %v817
    %1688 = vmatprep.subr.mxu0 0.0
    %1689 = vmatpush1.msra.mxu0 %v818
    %1690 = vmatprep.subr.mxu0 0.0
    %1691 = vmatpush1.msra.mxu0 %v819
    %1692 = vmatprep.subr.mxu0 0.0
    %1693 = vmatpush1.msra.mxu0 %v820
    %1694 = vmatprep.subr.mxu0 0.0
    %1695 = vmatpush1.msra.mxu0 %v821
    %1696 = vmatprep.subr.mxu0 0.0
    %1697 = vmatpush1.msra.mxu0 %v822
    %1698 = vmatprep.subr.mxu0 0.0
    %1699 = vmatpush1.msra.mxu0 %v823
    %1700 = vmatprep.subr.mxu0 0.0
    %1701 = vmatpush1.msra.mxu0 %v824
    %1702 = vmatprep.subr.mxu0 0.0
    %1703 = vmatpush1.msra.mxu0 %v825
    %1704 = vmatprep.subr.mxu0 0.0
    %1705 = vmatpush1.msra.mxu0 %v826
    %1706 = vmatprep.subr.mxu0 0.0
    %1707 = vmatpush1.msra.mxu0 %v827
    %1708 = vmatprep.subr.mxu0 0.0
    %1709 = vmatpush1.msra.mxu0 %v828
    %1710 = vmatprep.subr.mxu0 0.0
    %1711 = vmatpush1.msra.mxu0 %v829
    %1712 = vmatprep.subr.mxu0 0.0
    %1713 = vmatpush1.msra.mxu0 %v830
    %1714 = vmatprep.subr.mxu0 0.0
    %1715 = vmatpush1.msra.mxu0 %v831
    %1716 = vmatprep.subr.mxu0 0.0
    %1717 = vmatpush1.msra.mxu0 %v832
    %1718 = vmatprep.subr.mxu0 0.0
    %1719 = vmatpush1.msra.mxu0 %v833
    %1720 = vmatprep.subr.mxu0 0.0
    %1721 = vmatpush1.msra.mxu0 %v834
    %1722 = vmatprep.subr.mxu0 0.0
    %1723 = vmatpush1.msra.mxu0 %v835
    %1724 = vmatprep.subr.mxu0 0.0
    %1725 = vmatpush1.msra.mxu0 %v836
    %1726 = vmatprep.subr.mxu0 0.0
    %1727 = vmatpush1.msra.mxu0 %v837
    %1728 = vmatprep.subr.mxu0 0.0
    %1729 = vmatpush1.msra.mxu0 %v838
    %1730 = vmatprep.subr.mxu0 0.0
    %1731 = vmatpush1.msra.mxu0 %v839
    %1732 = vmatprep.subr.mxu0 0.0
    %1733 = vmatpush1.msra.mxu0 %v840
    %1734 = vmatprep.subr.mxu0 0.0
    %1735 = vmatpush1.msra.mxu0 %v841
    %1736 = vmatprep.subr.mxu0 0.0
    %1737 = vmatpush1.msra.mxu0 %v842
    %1738 = vmatprep.subr.mxu0 0.0
    %1739 = vmatpush1.msra.mxu0 %v843
    %1740 = vmatprep.mubr.f32.mxu0 %v51
    %1741 = vmatmul.mubr.f32.gmra.mrb[0].mxu0 %v50
    %v1742 = vpop.f32.mrb[0].mxu0
    %v1743 = vadd.f32 %v1668, %v1742
    %v1744 = vpop.f32.mrb[0].mxu0
    %1745 = vmatprep.mubr.f32.mxu0 %v75
    %1746 = vmatmul.mubr.f32.gmra.mrb[0].mxu0 %v74
    %v1747 = vpop.f32.mrb[0].mxu0
    %v1748 = vadd.f32 %v1673, %v1747
    %v1749 = vpop.f32.mrb[0].mxu0
    %1750 = vdwg.mxu0
    %1751 = vst [vmem:[%s3] sm:$0xff] %v1743
    %1752 = vst [vmem:[%s3 + $0x8] sm:$0xff] %v1748
    // Predicated region
    $region18: #{pixel_model_forward.1} parent=1 // pred_check
      _
    $region19: #{pixel_model_forward.1} parent=1 // pred_check_branch
      %1754 = sbr.rel (0) target = $region21
    $region20: #{pixel_model_forward.1} parent=1 // pred_region
      _
    $region21: #{pixel_model_forward.1} parent=1 // pred_fallthru
      _
    // Predicated region
    $region22: #{pixel_model_forward.1} parent=1 // pred_check
      _
    $region23: #{pixel_model_forward.1} parent=1 // pred_check_branch
      %1756 = sbr.rel (0) target = $region25
    $region24: #{pixel_model_forward.1} parent=1 // pred_region
      _
    $region25: #{pixel_model_forward.1} parent=1 // pred_fallthru
      _
    %1757 = vsyncpa [#allocation3], 1

</llo_original>
